<compile_context>
chip_gen: v5e
topology: v5e:2x2
jax: 0.10.0
libtpu: 0.0.40
codegen_flags: <defaults>
</compile_context>

<pallas_src>
import math

import jax
import jax.numpy as jnp
from jax.experimental import pallas as pl
from jax.experimental.pallas import tpu as pltpu

# ---------------------------------------------------------------------------
# model hyper-parameters (small, consistent with the module's forward)
# ---------------------------------------------------------------------------
B = 2            # batch
S = 8            # sequence length
D = 32           # model / latent dim
H = 4            # attention heads
DH = D // H      # per-head dim
F = 2 * D        # feed-forward hidden dim
NUM_LAYERS = 2

NEG_INF = -1e9   # additive mask value for disallowed attention


# ---------------------------------------------------------------------------
# Pallas kernel: the WHOLE transformer encoder (all layers, all batches)
# ---------------------------------------------------------------------------
def encoder_kernel(x_ref, mask_ref,
                   wqkv_ref, bqkv_ref, wo_ref, bo_ref,
                   g1_ref, beta1_ref, w1_ref, b1_ref, w2_ref, b2_ref,
                   g2_ref, beta2_ref,
                   o_ref):
    f32 = jnp.float32
    bf16 = jnp.bfloat16

    x = x_ref[...].astype(f32)         # (B*S, D) — stays resident across layers
    mask = mask_ref[...].astype(f32)   # (B*S, B*S) block-diagonal additive mask

    num_layers = wqkv_ref.shape[0]
    d_model = x.shape[-1]
    d_head = d_model // H
    scale = 1.0 / math.sqrt(d_head)

    def layer_norm(v, gamma, beta):
        mu = jnp.mean(v, axis=-1, keepdims=True)
        var = jnp.mean(jnp.square(v - mu), axis=-1, keepdims=True)
        return (v - mu) * jax.lax.rsqrt(var + 1e-5) * gamma + beta

    # static (fully unrolled) loop over layers: weights indexed with a
    # Python int -> plain VMEM loads, no dynamic control flow needed.
    for l in range(num_layers):
        # ----- fused QKV projection (one MXU matmul, bf16 in / f32 acc) -----
        qkv = jnp.dot(x.astype(bf16), wqkv_ref[l],
                      preferred_element_type=f32) + bqkv_ref[l]
        q = (qkv[:, 0:d_model] * scale).astype(bf16)
        k = qkv[:, d_model:2 * d_model].astype(bf16)
        v = qkv[:, 2 * d_model:3 * d_model].astype(bf16)

        # ----- multi-head attention over the flattened (B*S) token axis -----
        heads = []
        for h in range(H):                      # tiny static head loop
            lo = h * d_head
            qh = q[:, lo:lo + d_head]
            kh = k[:, lo:lo + d_head]
            vh = v[:, lo:lo + d_head]
            # (B*S, B*S) logits; block-diagonal mask keeps batches independent
            logits = jax.lax.dot_general(
                qh, kh, (((1,), (1,)), ((), ())),
                preferred_element_type=f32) + mask
            logits = logits - jnp.max(logits, axis=-1, keepdims=True)
            p = jnp.exp(logits)
            inv = pl.reciprocal(jnp.sum(p, axis=-1, keepdims=True), approx=True)
            p = p * inv
            heads.append(jnp.dot(p.astype(bf16), vh,
                                 preferred_element_type=f32))
        attn = jnp.concatenate(heads, axis=-1)                    # (B*S, D)
        attn = jnp.dot(attn.astype(bf16), wo_ref[l],
                       preferred_element_type=f32) + bo_ref[l]

        # ----- residual + LayerNorm 1 ---------------------------------------
        net = layer_norm(x + attn, g1_ref[l], beta1_ref[l])

        # ----- feed-forward (ReLU) ------------------------------------------
        ff = jnp.dot(net.astype(bf16), w1_ref[l],
                     preferred_element_type=f32) + b1_ref[l]
        ff = jnp.maximum(ff, 0.0)
        ff = jnp.dot(ff.astype(bf16), w2_ref[l],
                     preferred_element_type=f32) + b2_ref[l]

        # ----- residual + LayerNorm 2 ---------------------------------------
        x = layer_norm(net + ff, g2_ref[l], beta2_ref[l])

    o_ref[...] = x.astype(o_ref.dtype)


# ---------------------------------------------------------------------------
# wrapper: ONE pallas_call for the whole encoder
# ---------------------------------------------------------------------------
def _full_spec(arr):
    zeros = (0,) * arr.ndim
    return pl.BlockSpec(arr.shape, lambda i, _z=zeros: _z)


@jax.jit
def transformer_encoder(net, mask, params):
    b, s, d = net.shape
    bs = b * s
    x2d = net.reshape(bs, d).astype(jnp.float32)

    # Block-diagonal additive mask over the flattened token axis: cross-batch
    # logits get NEG_INF (exp underflows to exactly 0 in f32 after the max
    # subtraction), diagonal blocks carry the user-provided additive mask.
    big_mask = jnp.full((bs, bs), NEG_INF, dtype=jnp.float32)
    for i in range(b):
        big_mask = big_mask.at[i * s:(i + 1) * s, i * s:(i + 1) * s].set(
            mask[i].astype(jnp.float32))

    inputs = (x2d, big_mask) + tuple(params)
    out2d = pl.pallas_call(
        encoder_kernel,
        out_shape=jax.ShapeDtypeStruct((bs, d), jnp.float32),
        grid_spec=pltpu.PrefetchScalarGridSpec(
            num_scalar_prefetch=0,
            grid=(1,),                       # single grid step: whole problem
            in_specs=[_full_spec(a) for a in inputs],
            out_specs=pl.BlockSpec((bs, d), lambda i: (0, 0)),
        ),
        compiler_params=pltpu.CompilerParams(
            dimension_semantics=("arbitrary",),
        ),
    )(*inputs)
    return out2d.reshape(b, s, d)


# ---------------------------------------------------------------------------
# deterministic parameter initialization (shapes from the module's __init__)
# ---------------------------------------------------------------------------
PARAM_ORDER = ("wqkv", "bqkv", "wo", "bo", "g1", "beta1",
               "w1", "b1", "w2", "b2", "g2", "beta2")
MATMUL_WEIGHTS = ("wqkv", "wo", "w1", "w2")  # stored bf16 (f32 accumulation)


def init_layer_params(key):
    ks = jax.random.split(key, 6)

    def lin(k, fan_in, fan_out):
        bound = 1.0 / math.sqrt(fan_in)
        kw, kb = jax.random.split(k)
        w = jax.random.uniform(kw, (fan_in, fan_out), jnp.float32, -bound, bound)
        bias = jax.random.uniform(kb, (1, fan_out), jnp.float32, -bound, bound)
        return w, bias

    wq, bq = lin(ks[0], D, D)
    wk, bk = lin(ks[1], D, D)
    wv, bv = lin(ks[2], D, D)
    wo, bo = lin(ks[3], D, D)
    w1, b1 = lin(ks[4], D, F)
    w2, b2 = lin(ks[5], F, D)
    return dict(
        wqkv=jnp.concatenate([wq, wk, wv], axis=1),   # (D, 3D) fused QKV
        bqkv=jnp.concatenate([bq, bk, bv], axis=1),   # (1, 3D)
        wo=wo, bo=bo,
        g1=jnp.ones((1, D), jnp.float32), beta1=jnp.zeros((1, D), jnp.float32),
        w1=w1, b1=b1, w2=w2, b2=b2,
        g2=jnp.ones((1, D), jnp.float32), beta2=jnp.zeros((1, D), jnp.float32),
    )


def stack_layer_params(per_layer):
    stacked = []
    for name in PARAM_ORDER:
        arr = jnp.stack([p[name] for p in per_layer], axis=0)   # (L, ...)
        if name in MATMUL_WEIGHTS:
            arr = arr.astype(jnp.bfloat16)
        stacked.append(arr)
    return tuple(stacked)


if __name__ == "__main__":
    root = jax.random.PRNGKey(0)
    k_net, k_mask, *k_layers = jax.random.split(root, 2 + NUM_LAYERS)

    # input activations (B, S, D)
    net = jax.random.normal(k_net, (B, S, D), jnp.float32)

    # additive attention mask (B, S, S): block attention to the last key
    # position for batch element 1, fully open for batch element 0
    mask = jnp.zeros((B, S, S), jnp.float32)
    mask = mask.at[1, :, S - 1].set(NEG_INF)

    layer_params = [init_layer_params(k) for k in k_layers]
    params = stack_layer_params(layer_params)

    out = transformer_encoder(net, mask, params)
    out = jax.block_until_ready(out)

    assert out.shape == (B, S, D)
    assert bool(jnp.all(jnp.isfinite(out)))
    print("KERNEL_OK")
</pallas_src>

<mosaic_0001>
module attributes {stable_mosaic.version = 11 : i64} {
  func.func @encoder_kernel(%arg0: i32, %arg1: memref<16x32xf32, #tpu.memory_space<vmem>>, %arg2: memref<16x16xf32, #tpu.memory_space<vmem>>, %arg3: memref<2x32x96xbf16, #tpu.memory_space<vmem>>, %arg4: memref<2x1x96xf32, #tpu.memory_space<vmem>>, %arg5: memref<2x32x32xbf16, #tpu.memory_space<vmem>>, %arg6: memref<2x1x32xf32, #tpu.memory_space<vmem>>, %arg7: memref<2x1x32xf32, #tpu.memory_space<vmem>>, %arg8: memref<2x1x32xf32, #tpu.memory_space<vmem>>, %arg9: memref<2x32x64xbf16, #tpu.memory_space<vmem>>, %arg10: memref<2x1x64xf32, #tpu.memory_space<vmem>>, %arg11: memref<2x64x32xbf16, #tpu.memory_space<vmem>>, %arg12: memref<2x1x32xf32, #tpu.memory_space<vmem>>, %arg13: memref<2x1x32xf32, #tpu.memory_space<vmem>>, %arg14: memref<2x1x32xf32, #tpu.memory_space<vmem>>, %arg15: memref<16x32xf32, #tpu.memory_space<vmem>>) attributes {dimension_semantics = [#tpu.dimension_semantics<arbitrary>], iteration_bounds = array<i64: 1>, scalar_prefetch = 0 : i64, scratch_operands = 0 : i64, tpu.core_type = #tpu.core_type<tc>, window_params = [{pipeline_mode = #tpu.pipeline_mode<synchronous>, transform_indices = @transform_0, window_bounds = array<i64: 16, 32>}, {pipeline_mode = #tpu.pipeline_mode<synchronous>, transform_indices = @transform_1, window_bounds = array<i64: 16, 16>}, {pipeline_mode = #tpu.pipeline_mode<synchronous>, transform_indices = @transform_2, window_bounds = array<i64: 2, 32, 96>}, {pipeline_mode = #tpu.pipeline_mode<synchronous>, transform_indices = @transform_3, window_bounds = array<i64: 2, 1, 96>}, {pipeline_mode = #tpu.pipeline_mode<synchronous>, transform_indices = @transform_4, window_bounds = array<i64: 2, 32, 32>}, {pipeline_mode = #tpu.pipeline_mode<synchronous>, transform_indices = @transform_5, window_bounds = array<i64: 2, 1, 32>}, {pipeline_mode = #tpu.pipeline_mode<synchronous>, transform_indices = @transform_6, window_bounds = array<i64: 2, 1, 32>}, {pipeline_mode = #tpu.pipeline_mode<synchronous>, transform_indices = @transform_7, window_bounds = array<i64: 2, 1, 32>}, {pipeline_mode = #tpu.pipeline_mode<synchronous>, transform_indices = @transform_8, window_bounds = array<i64: 2, 32, 64>}, {pipeline_mode = #tpu.pipeline_mode<synchronous>, transform_indices = @transform_9, window_bounds = array<i64: 2, 1, 64>}, {pipeline_mode = #tpu.pipeline_mode<synchronous>, transform_indices = @transform_10, window_bounds = array<i64: 2, 64, 32>}, {pipeline_mode = #tpu.pipeline_mode<synchronous>, transform_indices = @transform_11, window_bounds = array<i64: 2, 1, 32>}, {pipeline_mode = #tpu.pipeline_mode<synchronous>, transform_indices = @transform_12, window_bounds = array<i64: 2, 1, 32>}, {pipeline_mode = #tpu.pipeline_mode<synchronous>, transform_indices = @transform_13, window_bounds = array<i64: 2, 1, 32>}, {pipeline_mode = #tpu.pipeline_mode<synchronous>, transform_indices = @transform_14, window_bounds = array<i64: 16, 32>}]} {
    %c0 = arith.constant 0 : index
    %c0_0 = arith.constant 0 : index
    %0 = vector.load %arg1[%c0, %c0_0] : memref<16x32xf32, #tpu.memory_space<vmem>>, vector<16x32xf32>
    %c0_1 = arith.constant 0 : index
    %c0_2 = arith.constant 0 : index
    %1 = vector.load %arg2[%c0_1, %c0_2] : memref<16x16xf32, #tpu.memory_space<vmem>>, vector<16x16xf32>
    %2 = arith.truncf %0 : vector<16x32xf32> to vector<16x32xbf16>
    %c0_3 = arith.constant 0 : index
    %c0_4 = arith.constant 0 : index
    %c0_5 = arith.constant 0 : index
    %3 = vector.load %arg3[%c0_3, %c0_4, %c0_5] : memref<2x32x96xbf16, #tpu.memory_space<vmem>>, vector<1x32x96xbf16>
    %4 = vector.shape_cast %3 : vector<1x32x96xbf16> to vector<32x96xbf16>
    %cst = arith.constant dense<0.000000e+00> : vector<16x96xf32>
    %5 = tpu.matmul %2, %4, %cst {dimension_numbers = #tpu.dot_dimension_numbers<[1], [0], [0], [1], [0, 0, 1, 1], [], []>} : vector<16x32xbf16>, vector<32x96xbf16>, vector<16x96xf32> -> vector<16x96xf32>
    %c0_6 = arith.constant 0 : index
    %c0_7 = arith.constant 0 : index
    %c0_8 = arith.constant 0 : index
    %6 = vector.load %arg4[%c0_6, %c0_7, %c0_8] : memref<2x1x96xf32, #tpu.memory_space<vmem>>, vector<1x1x96xf32>
    %7 = vector.shape_cast %6 : vector<1x1x96xf32> to vector<1x96xf32>
    %8 = vector.broadcast %7 : vector<1x96xf32> to vector<16x96xf32>
    %9 = arith.addf %5, %8 : vector<16x96xf32>
    %10 = vector.extract_strided_slice %9 {offsets = [0, 0], sizes = [16, 32], strides = [1, 1]} : vector<16x96xf32> to vector<16x32xf32>
    %cst_9 = arith.constant 0.353553385 : f32
    %11 = vector.broadcast %cst_9 : f32 to vector<16x32xf32>
    %12 = arith.mulf %10, %11 : vector<16x32xf32>
    %13 = arith.truncf %12 : vector<16x32xf32> to vector<16x32xbf16>
    %14 = vector.extract_strided_slice %9 {offsets = [0, 32], sizes = [16, 32], strides = [1, 1]} : vector<16x96xf32> to vector<16x32xf32>
    %15 = arith.truncf %14 : vector<16x32xf32> to vector<16x32xbf16>
    %16 = vector.extract_strided_slice %9 {offsets = [0, 64], sizes = [16, 32], strides = [1, 1]} : vector<16x96xf32> to vector<16x32xf32>
    %17 = arith.truncf %16 : vector<16x32xf32> to vector<16x32xbf16>
    %18 = vector.extract_strided_slice %13 {offsets = [0, 0], sizes = [16, 8], strides = [1, 1]} : vector<16x32xbf16> to vector<16x8xbf16>
    %19 = vector.extract_strided_slice %15 {offsets = [0, 0], sizes = [16, 8], strides = [1, 1]} : vector<16x32xbf16> to vector<16x8xbf16>
    %20 = vector.extract_strided_slice %17 {offsets = [0, 0], sizes = [16, 8], strides = [1, 1]} : vector<16x32xbf16> to vector<16x8xbf16>
    %cst_10 = arith.constant dense<0.000000e+00> : vector<16x16xf32>
    %21 = tpu.matmul %18, %19, %cst_10 {dimension_numbers = #tpu.dot_dimension_numbers<[1], [1], [0], [0], [0, 0, 1, 0], [], []>} : vector<16x8xbf16>, vector<16x8xbf16>, vector<16x16xf32> -> vector<16x16xf32>
    %22 = arith.addf %21, %1 : vector<16x16xf32>
    %cst_11 = arith.constant dense<0xFF800000> : vector<16xf32>
    %23 = vector.multi_reduction <maximumf>, %22, %cst_11 [1] : vector<16x16xf32> to vector<16xf32>
    %24 = vector.shape_cast %23 : vector<16xf32> to vector<16x1xf32>
    %25 = vector.broadcast %24 : vector<16x1xf32> to vector<16x16xf32>
    %26 = arith.subf %22, %25 : vector<16x16xf32>
    %27 = math.exp %26 : vector<16x16xf32>
    %cst_12 = arith.constant dense<0.000000e+00> : vector<16xf32>
    %28 = vector.multi_reduction <add>, %27, %cst_12 [1] : vector<16x16xf32> to vector<16xf32>
    %29 = vector.shape_cast %28 : vector<16xf32> to vector<16x1xf32>
    %30 = tpu.reciprocal %29 {approx = true} : vector<16x1xf32> -> vector<16x1xf32>
    %31 = vector.broadcast %30 : vector<16x1xf32> to vector<16x16xf32>
    %32 = arith.mulf %27, %31 : vector<16x16xf32>
    %33 = arith.truncf %32 : vector<16x16xf32> to vector<16x16xbf16>
    %cst_13 = arith.constant dense<0.000000e+00> : vector<16x8xf32>
    %34 = tpu.matmul %33, %20, %cst_13 {dimension_numbers = #tpu.dot_dimension_numbers<[1], [0], [0], [1], [0, 0, 1, 1], [], []>} : vector<16x16xbf16>, vector<16x8xbf16>, vector<16x8xf32> -> vector<16x8xf32>
    %35 = vector.extract_strided_slice %13 {offsets = [0, 8], sizes = [16, 8], strides = [1, 1]} : vector<16x32xbf16> to vector<16x8xbf16>
    %36 = vector.extract_strided_slice %15 {offsets = [0, 8], sizes = [16, 8], strides = [1, 1]} : vector<16x32xbf16> to vector<16x8xbf16>
    %37 = vector.extract_strided_slice %17 {offsets = [0, 8], sizes = [16, 8], strides = [1, 1]} : vector<16x32xbf16> to vector<16x8xbf16>
    %cst_14 = arith.constant dense<0.000000e+00> : vector<16x16xf32>
    %38 = tpu.matmul %35, %36, %cst_14 {dimension_numbers = #tpu.dot_dimension_numbers<[1], [1], [0], [0], [0, 0, 1, 0], [], []>} : vector<16x8xbf16>, vector<16x8xbf16>, vector<16x16xf32> -> vector<16x16xf32>
    %39 = arith.addf %38, %1 : vector<16x16xf32>
    %cst_15 = arith.constant dense<0xFF800000> : vector<16xf32>
    %40 = vector.multi_reduction <maximumf>, %39, %cst_15 [1] : vector<16x16xf32> to vector<16xf32>
    %41 = vector.shape_cast %40 : vector<16xf32> to vector<16x1xf32>
    %42 = vector.broadcast %41 : vector<16x1xf32> to vector<16x16xf32>
    %43 = arith.subf %39, %42 : vector<16x16xf32>
    %44 = math.exp %43 : vector<16x16xf32>
    %cst_16 = arith.constant dense<0.000000e+00> : vector<16xf32>
    %45 = vector.multi_reduction <add>, %44, %cst_16 [1] : vector<16x16xf32> to vector<16xf32>
    %46 = vector.shape_cast %45 : vector<16xf32> to vector<16x1xf32>
    %47 = tpu.reciprocal %46 {approx = true} : vector<16x1xf32> -> vector<16x1xf32>
    %48 = vector.broadcast %47 : vector<16x1xf32> to vector<16x16xf32>
    %49 = arith.mulf %44, %48 : vector<16x16xf32>
    %50 = arith.truncf %49 : vector<16x16xf32> to vector<16x16xbf16>
    %cst_17 = arith.constant dense<0.000000e+00> : vector<16x8xf32>
    %51 = tpu.matmul %50, %37, %cst_17 {dimension_numbers = #tpu.dot_dimension_numbers<[1], [0], [0], [1], [0, 0, 1, 1], [], []>} : vector<16x16xbf16>, vector<16x8xbf16>, vector<16x8xf32> -> vector<16x8xf32>
    %52 = vector.extract_strided_slice %13 {offsets = [0, 16], sizes = [16, 8], strides = [1, 1]} : vector<16x32xbf16> to vector<16x8xbf16>
    %53 = vector.extract_strided_slice %15 {offsets = [0, 16], sizes = [16, 8], strides = [1, 1]} : vector<16x32xbf16> to vector<16x8xbf16>
    %54 = vector.extract_strided_slice %17 {offsets = [0, 16], sizes = [16, 8], strides = [1, 1]} : vector<16x32xbf16> to vector<16x8xbf16>
    %cst_18 = arith.constant dense<0.000000e+00> : vector<16x16xf32>
    %55 = tpu.matmul %52, %53, %cst_18 {dimension_numbers = #tpu.dot_dimension_numbers<[1], [1], [0], [0], [0, 0, 1, 0], [], []>} : vector<16x8xbf16>, vector<16x8xbf16>, vector<16x16xf32> -> vector<16x16xf32>
    %56 = arith.addf %55, %1 : vector<16x16xf32>
    %cst_19 = arith.constant dense<0xFF800000> : vector<16xf32>
    %57 = vector.multi_reduction <maximumf>, %56, %cst_19 [1] : vector<16x16xf32> to vector<16xf32>
    %58 = vector.shape_cast %57 : vector<16xf32> to vector<16x1xf32>
    %59 = vector.broadcast %58 : vector<16x1xf32> to vector<16x16xf32>
    %60 = arith.subf %56, %59 : vector<16x16xf32>
    %61 = math.exp %60 : vector<16x16xf32>
    %cst_20 = arith.constant dense<0.000000e+00> : vector<16xf32>
    %62 = vector.multi_reduction <add>, %61, %cst_20 [1] : vector<16x16xf32> to vector<16xf32>
    %63 = vector.shape_cast %62 : vector<16xf32> to vector<16x1xf32>
    %64 = tpu.reciprocal %63 {approx = true} : vector<16x1xf32> -> vector<16x1xf32>
    %65 = vector.broadcast %64 : vector<16x1xf32> to vector<16x16xf32>
    %66 = arith.mulf %61, %65 : vector<16x16xf32>
    %67 = arith.truncf %66 : vector<16x16xf32> to vector<16x16xbf16>
    %cst_21 = arith.constant dense<0.000000e+00> : vector<16x8xf32>
    %68 = tpu.matmul %67, %54, %cst_21 {dimension_numbers = #tpu.dot_dimension_numbers<[1], [0], [0], [1], [0, 0, 1, 1], [], []>} : vector<16x16xbf16>, vector<16x8xbf16>, vector<16x8xf32> -> vector<16x8xf32>
    %69 = vector.extract_strided_slice %13 {offsets = [0, 24], sizes = [16, 8], strides = [1, 1]} : vector<16x32xbf16> to vector<16x8xbf16>
    %70 = vector.extract_strided_slice %15 {offsets = [0, 24], sizes = [16, 8], strides = [1, 1]} : vector<16x32xbf16> to vector<16x8xbf16>
    %71 = vector.extract_strided_slice %17 {offsets = [0, 24], sizes = [16, 8], strides = [1, 1]} : vector<16x32xbf16> to vector<16x8xbf16>
    %cst_22 = arith.constant dense<0.000000e+00> : vector<16x16xf32>
    %72 = tpu.matmul %69, %70, %cst_22 {dimension_numbers = #tpu.dot_dimension_numbers<[1], [1], [0], [0], [0, 0, 1, 0], [], []>} : vector<16x8xbf16>, vector<16x8xbf16>, vector<16x16xf32> -> vector<16x16xf32>
    %73 = arith.addf %72, %1 : vector<16x16xf32>
    %cst_23 = arith.constant dense<0xFF800000> : vector<16xf32>
    %74 = vector.multi_reduction <maximumf>, %73, %cst_23 [1] : vector<16x16xf32> to vector<16xf32>
    %75 = vector.shape_cast %74 : vector<16xf32> to vector<16x1xf32>
    %76 = vector.broadcast %75 : vector<16x1xf32> to vector<16x16xf32>
    %77 = arith.subf %73, %76 : vector<16x16xf32>
    %78 = math.exp %77 : vector<16x16xf32>
    %cst_24 = arith.constant dense<0.000000e+00> : vector<16xf32>
    %79 = vector.multi_reduction <add>, %78, %cst_24 [1] : vector<16x16xf32> to vector<16xf32>
    %80 = vector.shape_cast %79 : vector<16xf32> to vector<16x1xf32>
    %81 = tpu.reciprocal %80 {approx = true} : vector<16x1xf32> -> vector<16x1xf32>
    %82 = vector.broadcast %81 : vector<16x1xf32> to vector<16x16xf32>
    %83 = arith.mulf %78, %82 : vector<16x16xf32>
    %84 = arith.truncf %83 : vector<16x16xf32> to vector<16x16xbf16>
    %cst_25 = arith.constant dense<0.000000e+00> : vector<16x8xf32>
    %85 = tpu.matmul %84, %71, %cst_25 {dimension_numbers = #tpu.dot_dimension_numbers<[1], [0], [0], [1], [0, 0, 1, 1], [], []>} : vector<16x16xbf16>, vector<16x8xbf16>, vector<16x8xf32> -> vector<16x8xf32>
    %86 = tpu.concatenate %34, %51, %68, %85 in 1 : vector<16x8xf32>, vector<16x8xf32>, vector<16x8xf32>, vector<16x8xf32> -> vector<16x32xf32>
    %87 = arith.truncf %86 : vector<16x32xf32> to vector<16x32xbf16>
    %c0_26 = arith.constant 0 : index
    %c0_27 = arith.constant 0 : index
    %c0_28 = arith.constant 0 : index
    %88 = vector.load %arg5[%c0_26, %c0_27, %c0_28] : memref<2x32x32xbf16, #tpu.memory_space<vmem>>, vector<1x32x32xbf16>
    %89 = vector.shape_cast %88 : vector<1x32x32xbf16> to vector<32x32xbf16>
    %cst_29 = arith.constant dense<0.000000e+00> : vector<16x32xf32>
    %90 = tpu.matmul %87, %89, %cst_29 {dimension_numbers = #tpu.dot_dimension_numbers<[1], [0], [0], [1], [0, 0, 1, 1], [], []>} : vector<16x32xbf16>, vector<32x32xbf16>, vector<16x32xf32> -> vector<16x32xf32>
    %c0_30 = arith.constant 0 : index
    %c0_31 = arith.constant 0 : index
    %c0_32 = arith.constant 0 : index
    %91 = vector.load %arg6[%c0_30, %c0_31, %c0_32] : memref<2x1x32xf32, #tpu.memory_space<vmem>>, vector<1x1x32xf32>
    %92 = vector.shape_cast %91 : vector<1x1x32xf32> to vector<1x32xf32>
    %93 = vector.broadcast %92 : vector<1x32xf32> to vector<16x32xf32>
    %94 = arith.addf %90, %93 : vector<16x32xf32>
    %95 = arith.addf %0, %94 : vector<16x32xf32>
    %c0_33 = arith.constant 0 : index
    %c0_34 = arith.constant 0 : index
    %c0_35 = arith.constant 0 : index
    %96 = vector.load %arg7[%c0_33, %c0_34, %c0_35] : memref<2x1x32xf32, #tpu.memory_space<vmem>>, vector<1x1x32xf32>
    %97 = vector.shape_cast %96 : vector<1x1x32xf32> to vector<1x32xf32>
    %c0_36 = arith.constant 0 : index
    %c0_37 = arith.constant 0 : index
    %c0_38 = arith.constant 0 : index
    %98 = vector.load %arg8[%c0_36, %c0_37, %c0_38] : memref<2x1x32xf32, #tpu.memory_space<vmem>>, vector<1x1x32xf32>
    %99 = vector.shape_cast %98 : vector<1x1x32xf32> to vector<1x32xf32>
    %cst_39 = arith.constant dense<0.000000e+00> : vector<16xf32>
    %100 = vector.multi_reduction <add>, %95, %cst_39 [1] : vector<16x32xf32> to vector<16xf32>
    %101 = vector.shape_cast %100 : vector<16xf32> to vector<16x1xf32>
    %cst_40 = arith.constant 3.200000e+01 : f32
    %102 = vector.broadcast %cst_40 : f32 to vector<16x1xf32>
    %103 = arith.divf %101, %102 : vector<16x1xf32>
    %104 = vector.broadcast %103 : vector<16x1xf32> to vector<16x32xf32>
    %105 = arith.subf %95, %104 : vector<16x32xf32>
    %106 = arith.mulf %105, %105 : vector<16x32xf32>
    %cst_41 = arith.constant dense<0.000000e+00> : vector<16xf32>
    %107 = vector.multi_reduction <add>, %106, %cst_41 [1] : vector<16x32xf32> to vector<16xf32>
    %108 = vector.shape_cast %107 : vector<16xf32> to vector<16x1xf32>
    %cst_42 = arith.constant 3.200000e+01 : f32
    %109 = vector.broadcast %cst_42 : f32 to vector<16x1xf32>
    %110 = arith.divf %108, %109 : vector<16x1xf32>
    %111 = vector.broadcast %103 : vector<16x1xf32> to vector<16x32xf32>
    %112 = arith.subf %95, %111 : vector<16x32xf32>
    %cst_43 = arith.constant 9.99999974E-6 : f32
    %113 = vector.broadcast %cst_43 : f32 to vector<16x1xf32>
    %114 = arith.addf %110, %113 : vector<16x1xf32>
    %115 = math.rsqrt %114 : vector<16x1xf32>
    %116 = vector.broadcast %115 : vector<16x1xf32> to vector<16x32xf32>
    %117 = arith.mulf %112, %116 : vector<16x32xf32>
    %118 = vector.broadcast %97 : vector<1x32xf32> to vector<16x32xf32>
    %119 = arith.mulf %117, %118 : vector<16x32xf32>
    %120 = vector.broadcast %99 : vector<1x32xf32> to vector<16x32xf32>
    %121 = arith.addf %119, %120 : vector<16x32xf32>
    %122 = arith.truncf %121 : vector<16x32xf32> to vector<16x32xbf16>
    %c0_44 = arith.constant 0 : index
    %c0_45 = arith.constant 0 : index
    %c0_46 = arith.constant 0 : index
    %123 = vector.load %arg9[%c0_44, %c0_45, %c0_46] : memref<2x32x64xbf16, #tpu.memory_space<vmem>>, vector<1x32x64xbf16>
    %124 = vector.shape_cast %123 : vector<1x32x64xbf16> to vector<32x64xbf16>
    %cst_47 = arith.constant dense<0.000000e+00> : vector<16x64xf32>
    %125 = tpu.matmul %122, %124, %cst_47 {dimension_numbers = #tpu.dot_dimension_numbers<[1], [0], [0], [1], [0, 0, 1, 1], [], []>} : vector<16x32xbf16>, vector<32x64xbf16>, vector<16x64xf32> -> vector<16x64xf32>
    %c0_48 = arith.constant 0 : index
    %c0_49 = arith.constant 0 : index
    %c0_50 = arith.constant 0 : index
    %126 = vector.load %arg10[%c0_48, %c0_49, %c0_50] : memref<2x1x64xf32, #tpu.memory_space<vmem>>, vector<1x1x64xf32>
    %127 = vector.shape_cast %126 : vector<1x1x64xf32> to vector<1x64xf32>
    %128 = vector.broadcast %127 : vector<1x64xf32> to vector<16x64xf32>
    %129 = arith.addf %125, %128 : vector<16x64xf32>
    %cst_51 = arith.constant 0.000000e+00 : f32
    %130 = vector.broadcast %cst_51 : f32 to vector<16x64xf32>
    %131 = arith.maximumf %129, %130 : vector<16x64xf32>
    %132 = arith.truncf %131 : vector<16x64xf32> to vector<16x64xbf16>
    %c0_52 = arith.constant 0 : index
    %c0_53 = arith.constant 0 : index
    %c0_54 = arith.constant 0 : index
    %133 = vector.load %arg11[%c0_52, %c0_53, %c0_54] : memref<2x64x32xbf16, #tpu.memory_space<vmem>>, vector<1x64x32xbf16>
    %134 = vector.shape_cast %133 : vector<1x64x32xbf16> to vector<64x32xbf16>
    %cst_55 = arith.constant dense<0.000000e+00> : vector<16x32xf32>
    %135 = tpu.matmul %132, %134, %cst_55 {dimension_numbers = #tpu.dot_dimension_numbers<[1], [0], [0], [1], [0, 0, 1, 1], [], []>} : vector<16x64xbf16>, vector<64x32xbf16>, vector<16x32xf32> -> vector<16x32xf32>
    %c0_56 = arith.constant 0 : index
    %c0_57 = arith.constant 0 : index
    %c0_58 = arith.constant 0 : index
    %136 = vector.load %arg12[%c0_56, %c0_57, %c0_58] : memref<2x1x32xf32, #tpu.memory_space<vmem>>, vector<1x1x32xf32>
    %137 = vector.shape_cast %136 : vector<1x1x32xf32> to vector<1x32xf32>
    %138 = vector.broadcast %137 : vector<1x32xf32> to vector<16x32xf32>
    %139 = arith.addf %135, %138 : vector<16x32xf32>
    %140 = arith.addf %121, %139 : vector<16x32xf32>
    %c0_59 = arith.constant 0 : index
    %c0_60 = arith.constant 0 : index
    %c0_61 = arith.constant 0 : index
    %141 = vector.load %arg13[%c0_59, %c0_60, %c0_61] : memref<2x1x32xf32, #tpu.memory_space<vmem>>, vector<1x1x32xf32>
    %142 = vector.shape_cast %141 : vector<1x1x32xf32> to vector<1x32xf32>
    %c0_62 = arith.constant 0 : index
    %c0_63 = arith.constant 0 : index
    %c0_64 = arith.constant 0 : index
    %143 = vector.load %arg14[%c0_62, %c0_63, %c0_64] : memref<2x1x32xf32, #tpu.memory_space<vmem>>, vector<1x1x32xf32>
    %144 = vector.shape_cast %143 : vector<1x1x32xf32> to vector<1x32xf32>
    %cst_65 = arith.constant dense<0.000000e+00> : vector<16xf32>
    %145 = vector.multi_reduction <add>, %140, %cst_65 [1] : vector<16x32xf32> to vector<16xf32>
    %146 = vector.shape_cast %145 : vector<16xf32> to vector<16x1xf32>
    %cst_66 = arith.constant 3.200000e+01 : f32
    %147 = vector.broadcast %cst_66 : f32 to vector<16x1xf32>
    %148 = arith.divf %146, %147 : vector<16x1xf32>
    %149 = vector.broadcast %148 : vector<16x1xf32> to vector<16x32xf32>
    %150 = arith.subf %140, %149 : vector<16x32xf32>
    %151 = arith.mulf %150, %150 : vector<16x32xf32>
    %cst_67 = arith.constant dense<0.000000e+00> : vector<16xf32>
    %152 = vector.multi_reduction <add>, %151, %cst_67 [1] : vector<16x32xf32> to vector<16xf32>
    %153 = vector.shape_cast %152 : vector<16xf32> to vector<16x1xf32>
    %cst_68 = arith.constant 3.200000e+01 : f32
    %154 = vector.broadcast %cst_68 : f32 to vector<16x1xf32>
    %155 = arith.divf %153, %154 : vector<16x1xf32>
    %156 = vector.broadcast %148 : vector<16x1xf32> to vector<16x32xf32>
    %157 = arith.subf %140, %156 : vector<16x32xf32>
    %cst_69 = arith.constant 9.99999974E-6 : f32
    %158 = vector.broadcast %cst_69 : f32 to vector<16x1xf32>
    %159 = arith.addf %155, %158 : vector<16x1xf32>
    %160 = math.rsqrt %159 : vector<16x1xf32>
    %161 = vector.broadcast %160 : vector<16x1xf32> to vector<16x32xf32>
    %162 = arith.mulf %157, %161 : vector<16x32xf32>
    %163 = vector.broadcast %142 : vector<1x32xf32> to vector<16x32xf32>
    %164 = arith.mulf %162, %163 : vector<16x32xf32>
    %165 = vector.broadcast %144 : vector<1x32xf32> to vector<16x32xf32>
    %166 = arith.addf %164, %165 : vector<16x32xf32>
    %167 = arith.truncf %166 : vector<16x32xf32> to vector<16x32xbf16>
    %c1 = arith.constant 1 : index
    %c0_70 = arith.constant 0 : index
    %c0_71 = arith.constant 0 : index
    %168 = vector.load %arg3[%c1, %c0_70, %c0_71] : memref<2x32x96xbf16, #tpu.memory_space<vmem>>, vector<1x32x96xbf16>
    %169 = vector.shape_cast %168 : vector<1x32x96xbf16> to vector<32x96xbf16>
    %cst_72 = arith.constant dense<0.000000e+00> : vector<16x96xf32>
    %170 = tpu.matmul %167, %169, %cst_72 {dimension_numbers = #tpu.dot_dimension_numbers<[1], [0], [0], [1], [0, 0, 1, 1], [], []>} : vector<16x32xbf16>, vector<32x96xbf16>, vector<16x96xf32> -> vector<16x96xf32>
    %c1_73 = arith.constant 1 : index
    %c0_74 = arith.constant 0 : index
    %c0_75 = arith.constant 0 : index
    %171 = vector.load %arg4[%c1_73, %c0_74, %c0_75] : memref<2x1x96xf32, #tpu.memory_space<vmem>>, vector<1x1x96xf32>
    %172 = vector.shape_cast %171 : vector<1x1x96xf32> to vector<1x96xf32>
    %173 = vector.broadcast %172 : vector<1x96xf32> to vector<16x96xf32>
    %174 = arith.addf %170, %173 : vector<16x96xf32>
    %175 = vector.extract_strided_slice %174 {offsets = [0, 0], sizes = [16, 32], strides = [1, 1]} : vector<16x96xf32> to vector<16x32xf32>
    %cst_76 = arith.constant 0.353553385 : f32
    %176 = vector.broadcast %cst_76 : f32 to vector<16x32xf32>
    %177 = arith.mulf %175, %176 : vector<16x32xf32>
    %178 = arith.truncf %177 : vector<16x32xf32> to vector<16x32xbf16>
    %179 = vector.extract_strided_slice %174 {offsets = [0, 32], sizes = [16, 32], strides = [1, 1]} : vector<16x96xf32> to vector<16x32xf32>
    %180 = arith.truncf %179 : vector<16x32xf32> to vector<16x32xbf16>
    %181 = vector.extract_strided_slice %174 {offsets = [0, 64], sizes = [16, 32], strides = [1, 1]} : vector<16x96xf32> to vector<16x32xf32>
    %182 = arith.truncf %181 : vector<16x32xf32> to vector<16x32xbf16>
    %183 = vector.extract_strided_slice %178 {offsets = [0, 0], sizes = [16, 8], strides = [1, 1]} : vector<16x32xbf16> to vector<16x8xbf16>
    %184 = vector.extract_strided_slice %180 {offsets = [0, 0], sizes = [16, 8], strides = [1, 1]} : vector<16x32xbf16> to vector<16x8xbf16>
    %185 = vector.extract_strided_slice %182 {offsets = [0, 0], sizes = [16, 8], strides = [1, 1]} : vector<16x32xbf16> to vector<16x8xbf16>
    %cst_77 = arith.constant dense<0.000000e+00> : vector<16x16xf32>
    %186 = tpu.matmul %183, %184, %cst_77 {dimension_numbers = #tpu.dot_dimension_numbers<[1], [1], [0], [0], [0, 0, 1, 0], [], []>} : vector<16x8xbf16>, vector<16x8xbf16>, vector<16x16xf32> -> vector<16x16xf32>
    %187 = arith.addf %186, %1 : vector<16x16xf32>
    %cst_78 = arith.constant dense<0xFF800000> : vector<16xf32>
    %188 = vector.multi_reduction <maximumf>, %187, %cst_78 [1] : vector<16x16xf32> to vector<16xf32>
    %189 = vector.shape_cast %188 : vector<16xf32> to vector<16x1xf32>
    %190 = vector.broadcast %189 : vector<16x1xf32> to vector<16x16xf32>
    %191 = arith.subf %187, %190 : vector<16x16xf32>
    %192 = math.exp %191 : vector<16x16xf32>
    %cst_79 = arith.constant dense<0.000000e+00> : vector<16xf32>
    %193 = vector.multi_reduction <add>, %192, %cst_79 [1] : vector<16x16xf32> to vector<16xf32>
    %194 = vector.shape_cast %193 : vector<16xf32> to vector<16x1xf32>
    %195 = tpu.reciprocal %194 {approx = true} : vector<16x1xf32> -> vector<16x1xf32>
    %196 = vector.broadcast %195 : vector<16x1xf32> to vector<16x16xf32>
    %197 = arith.mulf %192, %196 : vector<16x16xf32>
    %198 = arith.truncf %197 : vector<16x16xf32> to vector<16x16xbf16>
    %cst_80 = arith.constant dense<0.000000e+00> : vector<16x8xf32>
    %199 = tpu.matmul %198, %185, %cst_80 {dimension_numbers = #tpu.dot_dimension_numbers<[1], [0], [0], [1], [0, 0, 1, 1], [], []>} : vector<16x16xbf16>, vector<16x8xbf16>, vector<16x8xf32> -> vector<16x8xf32>
    %200 = vector.extract_strided_slice %178 {offsets = [0, 8], sizes = [16, 8], strides = [1, 1]} : vector<16x32xbf16> to vector<16x8xbf16>
    %201 = vector.extract_strided_slice %180 {offsets = [0, 8], sizes = [16, 8], strides = [1, 1]} : vector<16x32xbf16> to vector<16x8xbf16>
    %202 = vector.extract_strided_slice %182 {offsets = [0, 8], sizes = [16, 8], strides = [1, 1]} : vector<16x32xbf16> to vector<16x8xbf16>
    %cst_81 = arith.constant dense<0.000000e+00> : vector<16x16xf32>
    %203 = tpu.matmul %200, %201, %cst_81 {dimension_numbers = #tpu.dot_dimension_numbers<[1], [1], [0], [0], [0, 0, 1, 0], [], []>} : vector<16x8xbf16>, vector<16x8xbf16>, vector<16x16xf32> -> vector<16x16xf32>
    %204 = arith.addf %203, %1 : vector<16x16xf32>
    %cst_82 = arith.constant dense<0xFF800000> : vector<16xf32>
    %205 = vector.multi_reduction <maximumf>, %204, %cst_82 [1] : vector<16x16xf32> to vector<16xf32>
    %206 = vector.shape_cast %205 : vector<16xf32> to vector<16x1xf32>
    %207 = vector.broadcast %206 : vector<16x1xf32> to vector<16x16xf32>
    %208 = arith.subf %204, %207 : vector<16x16xf32>
    %209 = math.exp %208 : vector<16x16xf32>
    %cst_83 = arith.constant dense<0.000000e+00> : vector<16xf32>
    %210 = vector.multi_reduction <add>, %209, %cst_83 [1] : vector<16x16xf32> to vector<16xf32>
    %211 = vector.shape_cast %210 : vector<16xf32> to vector<16x1xf32>
    %212 = tpu.reciprocal %211 {approx = true} : vector<16x1xf32> -> vector<16x1xf32>
    %213 = vector.broadcast %212 : vector<16x1xf32> to vector<16x16xf32>
    %214 = arith.mulf %209, %213 : vector<16x16xf32>
    %215 = arith.truncf %214 : vector<16x16xf32> to vector<16x16xbf16>
    %cst_84 = arith.constant dense<0.000000e+00> : vector<16x8xf32>
    %216 = tpu.matmul %215, %202, %cst_84 {dimension_numbers = #tpu.dot_dimension_numbers<[1], [0], [0], [1], [0, 0, 1, 1], [], []>} : vector<16x16xbf16>, vector<16x8xbf16>, vector<16x8xf32> -> vector<16x8xf32>
    %217 = vector.extract_strided_slice %178 {offsets = [0, 16], sizes = [16, 8], strides = [1, 1]} : vector<16x32xbf16> to vector<16x8xbf16>
    %218 = vector.extract_strided_slice %180 {offsets = [0, 16], sizes = [16, 8], strides = [1, 1]} : vector<16x32xbf16> to vector<16x8xbf16>
    %219 = vector.extract_strided_slice %182 {offsets = [0, 16], sizes = [16, 8], strides = [1, 1]} : vector<16x32xbf16> to vector<16x8xbf16>
    %cst_85 = arith.constant dense<0.000000e+00> : vector<16x16xf32>
    %220 = tpu.matmul %217, %218, %cst_85 {dimension_numbers = #tpu.dot_dimension_numbers<[1], [1], [0], [0], [0, 0, 1, 0], [], []>} : vector<16x8xbf16>, vector<16x8xbf16>, vector<16x16xf32> -> vector<16x16xf32>
    %221 = arith.addf %220, %1 : vector<16x16xf32>
    %cst_86 = arith.constant dense<0xFF800000> : vector<16xf32>
    %222 = vector.multi_reduction <maximumf>, %221, %cst_86 [1] : vector<16x16xf32> to vector<16xf32>
    %223 = vector.shape_cast %222 : vector<16xf32> to vector<16x1xf32>
    %224 = vector.broadcast %223 : vector<16x1xf32> to vector<16x16xf32>
    %225 = arith.subf %221, %224 : vector<16x16xf32>
    %226 = math.exp %225 : vector<16x16xf32>
    %cst_87 = arith.constant dense<0.000000e+00> : vector<16xf32>
    %227 = vector.multi_reduction <add>, %226, %cst_87 [1] : vector<16x16xf32> to vector<16xf32>
    %228 = vector.shape_cast %227 : vector<16xf32> to vector<16x1xf32>
    %229 = tpu.reciprocal %228 {approx = true} : vector<16x1xf32> -> vector<16x1xf32>
    %230 = vector.broadcast %229 : vector<16x1xf32> to vector<16x16xf32>
    %231 = arith.mulf %226, %230 : vector<16x16xf32>
    %232 = arith.truncf %231 : vector<16x16xf32> to vector<16x16xbf16>
    %cst_88 = arith.constant dense<0.000000e+00> : vector<16x8xf32>
    %233 = tpu.matmul %232, %219, %cst_88 {dimension_numbers = #tpu.dot_dimension_numbers<[1], [0], [0], [1], [0, 0, 1, 1], [], []>} : vector<16x16xbf16>, vector<16x8xbf16>, vector<16x8xf32> -> vector<16x8xf32>
    %234 = vector.extract_strided_slice %178 {offsets = [0, 24], sizes = [16, 8], strides = [1, 1]} : vector<16x32xbf16> to vector<16x8xbf16>
    %235 = vector.extract_strided_slice %180 {offsets = [0, 24], sizes = [16, 8], strides = [1, 1]} : vector<16x32xbf16> to vector<16x8xbf16>
    %236 = vector.extract_strided_slice %182 {offsets = [0, 24], sizes = [16, 8], strides = [1, 1]} : vector<16x32xbf16> to vector<16x8xbf16>
    %cst_89 = arith.constant dense<0.000000e+00> : vector<16x16xf32>
    %237 = tpu.matmul %234, %235, %cst_89 {dimension_numbers = #tpu.dot_dimension_numbers<[1], [1], [0], [0], [0, 0, 1, 0], [], []>} : vector<16x8xbf16>, vector<16x8xbf16>, vector<16x16xf32> -> vector<16x16xf32>
    %238 = arith.addf %237, %1 : vector<16x16xf32>
    %cst_90 = arith.constant dense<0xFF800000> : vector<16xf32>
    %239 = vector.multi_reduction <maximumf>, %238, %cst_90 [1] : vector<16x16xf32> to vector<16xf32>
    %240 = vector.shape_cast %239 : vector<16xf32> to vector<16x1xf32>
    %241 = vector.broadcast %240 : vector<16x1xf32> to vector<16x16xf32>
    %242 = arith.subf %238, %241 : vector<16x16xf32>
    %243 = math.exp %242 : vector<16x16xf32>
    %cst_91 = arith.constant dense<0.000000e+00> : vector<16xf32>
    %244 = vector.multi_reduction <add>, %243, %cst_91 [1] : vector<16x16xf32> to vector<16xf32>
    %245 = vector.shape_cast %244 : vector<16xf32> to vector<16x1xf32>
    %246 = tpu.reciprocal %245 {approx = true} : vector<16x1xf32> -> vector<16x1xf32>
    %247 = vector.broadcast %246 : vector<16x1xf32> to vector<16x16xf32>
    %248 = arith.mulf %243, %247 : vector<16x16xf32>
    %249 = arith.truncf %248 : vector<16x16xf32> to vector<16x16xbf16>
    %cst_92 = arith.constant dense<0.000000e+00> : vector<16x8xf32>
    %250 = tpu.matmul %249, %236, %cst_92 {dimension_numbers = #tpu.dot_dimension_numbers<[1], [0], [0], [1], [0, 0, 1, 1], [], []>} : vector<16x16xbf16>, vector<16x8xbf16>, vector<16x8xf32> -> vector<16x8xf32>
    %251 = tpu.concatenate %199, %216, %233, %250 in 1 : vector<16x8xf32>, vector<16x8xf32>, vector<16x8xf32>, vector<16x8xf32> -> vector<16x32xf32>
    %252 = arith.truncf %251 : vector<16x32xf32> to vector<16x32xbf16>
    %c1_93 = arith.constant 1 : index
    %c0_94 = arith.constant 0 : index
    %c0_95 = arith.constant 0 : index
    %253 = vector.load %arg5[%c1_93, %c0_94, %c0_95] : memref<2x32x32xbf16, #tpu.memory_space<vmem>>, vector<1x32x32xbf16>
    %254 = vector.shape_cast %253 : vector<1x32x32xbf16> to vector<32x32xbf16>
    %cst_96 = arith.constant dense<0.000000e+00> : vector<16x32xf32>
    %255 = tpu.matmul %252, %254, %cst_96 {dimension_numbers = #tpu.dot_dimension_numbers<[1], [0], [0], [1], [0, 0, 1, 1], [], []>} : vector<16x32xbf16>, vector<32x32xbf16>, vector<16x32xf32> -> vector<16x32xf32>
    %c1_97 = arith.constant 1 : index
    %c0_98 = arith.constant 0 : index
    %c0_99 = arith.constant 0 : index
    %256 = vector.load %arg6[%c1_97, %c0_98, %c0_99] : memref<2x1x32xf32, #tpu.memory_space<vmem>>, vector<1x1x32xf32>
    %257 = vector.shape_cast %256 : vector<1x1x32xf32> to vector<1x32xf32>
    %258 = vector.broadcast %257 : vector<1x32xf32> to vector<16x32xf32>
    %259 = arith.addf %255, %258 : vector<16x32xf32>
    %260 = arith.addf %166, %259 : vector<16x32xf32>
    %c1_100 = arith.constant 1 : index
    %c0_101 = arith.constant 0 : index
    %c0_102 = arith.constant 0 : index
    %261 = vector.load %arg7[%c1_100, %c0_101, %c0_102] : memref<2x1x32xf32, #tpu.memory_space<vmem>>, vector<1x1x32xf32>
    %262 = vector.shape_cast %261 : vector<1x1x32xf32> to vector<1x32xf32>
    %c1_103 = arith.constant 1 : index
    %c0_104 = arith.constant 0 : index
    %c0_105 = arith.constant 0 : index
    %263 = vector.load %arg8[%c1_103, %c0_104, %c0_105] : memref<2x1x32xf32, #tpu.memory_space<vmem>>, vector<1x1x32xf32>
    %264 = vector.shape_cast %263 : vector<1x1x32xf32> to vector<1x32xf32>
    %cst_106 = arith.constant dense<0.000000e+00> : vector<16xf32>
    %265 = vector.multi_reduction <add>, %260, %cst_106 [1] : vector<16x32xf32> to vector<16xf32>
    %266 = vector.shape_cast %265 : vector<16xf32> to vector<16x1xf32>
    %cst_107 = arith.constant 3.200000e+01 : f32
    %267 = vector.broadcast %cst_107 : f32 to vector<16x1xf32>
    %268 = arith.divf %266, %267 : vector<16x1xf32>
    %269 = vector.broadcast %268 : vector<16x1xf32> to vector<16x32xf32>
    %270 = arith.subf %260, %269 : vector<16x32xf32>
    %271 = arith.mulf %270, %270 : vector<16x32xf32>
    %cst_108 = arith.constant dense<0.000000e+00> : vector<16xf32>
    %272 = vector.multi_reduction <add>, %271, %cst_108 [1] : vector<16x32xf32> to vector<16xf32>
    %273 = vector.shape_cast %272 : vector<16xf32> to vector<16x1xf32>
    %cst_109 = arith.constant 3.200000e+01 : f32
    %274 = vector.broadcast %cst_109 : f32 to vector<16x1xf32>
    %275 = arith.divf %273, %274 : vector<16x1xf32>
    %276 = vector.broadcast %268 : vector<16x1xf32> to vector<16x32xf32>
    %277 = arith.subf %260, %276 : vector<16x32xf32>
    %cst_110 = arith.constant 9.99999974E-6 : f32
    %278 = vector.broadcast %cst_110 : f32 to vector<16x1xf32>
    %279 = arith.addf %275, %278 : vector<16x1xf32>
    %280 = math.rsqrt %279 : vector<16x1xf32>
    %281 = vector.broadcast %280 : vector<16x1xf32> to vector<16x32xf32>
    %282 = arith.mulf %277, %281 : vector<16x32xf32>
    %283 = vector.broadcast %262 : vector<1x32xf32> to vector<16x32xf32>
    %284 = arith.mulf %282, %283 : vector<16x32xf32>
    %285 = vector.broadcast %264 : vector<1x32xf32> to vector<16x32xf32>
    %286 = arith.addf %284, %285 : vector<16x32xf32>
    %287 = arith.truncf %286 : vector<16x32xf32> to vector<16x32xbf16>
    %c1_111 = arith.constant 1 : index
    %c0_112 = arith.constant 0 : index
    %c0_113 = arith.constant 0 : index
    %288 = vector.load %arg9[%c1_111, %c0_112, %c0_113] : memref<2x32x64xbf16, #tpu.memory_space<vmem>>, vector<1x32x64xbf16>
    %289 = vector.shape_cast %288 : vector<1x32x64xbf16> to vector<32x64xbf16>
    %cst_114 = arith.constant dense<0.000000e+00> : vector<16x64xf32>
    %290 = tpu.matmul %287, %289, %cst_114 {dimension_numbers = #tpu.dot_dimension_numbers<[1], [0], [0], [1], [0, 0, 1, 1], [], []>} : vector<16x32xbf16>, vector<32x64xbf16>, vector<16x64xf32> -> vector<16x64xf32>
    %c1_115 = arith.constant 1 : index
    %c0_116 = arith.constant 0 : index
    %c0_117 = arith.constant 0 : index
    %291 = vector.load %arg10[%c1_115, %c0_116, %c0_117] : memref<2x1x64xf32, #tpu.memory_space<vmem>>, vector<1x1x64xf32>
    %292 = vector.shape_cast %291 : vector<1x1x64xf32> to vector<1x64xf32>
    %293 = vector.broadcast %292 : vector<1x64xf32> to vector<16x64xf32>
    %294 = arith.addf %290, %293 : vector<16x64xf32>
    %cst_118 = arith.constant 0.000000e+00 : f32
    %295 = vector.broadcast %cst_118 : f32 to vector<16x64xf32>
    %296 = arith.maximumf %294, %295 : vector<16x64xf32>
    %297 = arith.truncf %296 : vector<16x64xf32> to vector<16x64xbf16>
    %c1_119 = arith.constant 1 : index
    %c0_120 = arith.constant 0 : index
    %c0_121 = arith.constant 0 : index
    %298 = vector.load %arg11[%c1_119, %c0_120, %c0_121] : memref<2x64x32xbf16, #tpu.memory_space<vmem>>, vector<1x64x32xbf16>
    %299 = vector.shape_cast %298 : vector<1x64x32xbf16> to vector<64x32xbf16>
    %cst_122 = arith.constant dense<0.000000e+00> : vector<16x32xf32>
    %300 = tpu.matmul %297, %299, %cst_122 {dimension_numbers = #tpu.dot_dimension_numbers<[1], [0], [0], [1], [0, 0, 1, 1], [], []>} : vector<16x64xbf16>, vector<64x32xbf16>, vector<16x32xf32> -> vector<16x32xf32>
    %c1_123 = arith.constant 1 : index
    %c0_124 = arith.constant 0 : index
    %c0_125 = arith.constant 0 : index
    %301 = vector.load %arg12[%c1_123, %c0_124, %c0_125] : memref<2x1x32xf32, #tpu.memory_space<vmem>>, vector<1x1x32xf32>
    %302 = vector.shape_cast %301 : vector<1x1x32xf32> to vector<1x32xf32>
    %303 = vector.broadcast %302 : vector<1x32xf32> to vector<16x32xf32>
    %304 = arith.addf %300, %303 : vector<16x32xf32>
    %305 = arith.addf %286, %304 : vector<16x32xf32>
    %c1_126 = arith.constant 1 : index
    %c0_127 = arith.constant 0 : index
    %c0_128 = arith.constant 0 : index
    %306 = vector.load %arg13[%c1_126, %c0_127, %c0_128] : memref<2x1x32xf32, #tpu.memory_space<vmem>>, vector<1x1x32xf32>
    %307 = vector.shape_cast %306 : vector<1x1x32xf32> to vector<1x32xf32>
    %c1_129 = arith.constant 1 : index
    %c0_130 = arith.constant 0 : index
    %c0_131 = arith.constant 0 : index
    %308 = vector.load %arg14[%c1_129, %c0_130, %c0_131] : memref<2x1x32xf32, #tpu.memory_space<vmem>>, vector<1x1x32xf32>
    %309 = vector.shape_cast %308 : vector<1x1x32xf32> to vector<1x32xf32>
    %cst_132 = arith.constant dense<0.000000e+00> : vector<16xf32>
    %310 = vector.multi_reduction <add>, %305, %cst_132 [1] : vector<16x32xf32> to vector<16xf32>
    %311 = vector.shape_cast %310 : vector<16xf32> to vector<16x1xf32>
    %cst_133 = arith.constant 3.200000e+01 : f32
    %312 = vector.broadcast %cst_133 : f32 to vector<16x1xf32>
    %313 = arith.divf %311, %312 : vector<16x1xf32>
    %314 = vector.broadcast %313 : vector<16x1xf32> to vector<16x32xf32>
    %315 = arith.subf %305, %314 : vector<16x32xf32>
    %316 = arith.mulf %315, %315 : vector<16x32xf32>
    %cst_134 = arith.constant dense<0.000000e+00> : vector<16xf32>
    %317 = vector.multi_reduction <add>, %316, %cst_134 [1] : vector<16x32xf32> to vector<16xf32>
    %318 = vector.shape_cast %317 : vector<16xf32> to vector<16x1xf32>
    %cst_135 = arith.constant 3.200000e+01 : f32
    %319 = vector.broadcast %cst_135 : f32 to vector<16x1xf32>
    %320 = arith.divf %318, %319 : vector<16x1xf32>
    %321 = vector.broadcast %313 : vector<16x1xf32> to vector<16x32xf32>
    %322 = arith.subf %305, %321 : vector<16x32xf32>
    %cst_136 = arith.constant 9.99999974E-6 : f32
    %323 = vector.broadcast %cst_136 : f32 to vector<16x1xf32>
    %324 = arith.addf %320, %323 : vector<16x1xf32>
    %325 = math.rsqrt %324 : vector<16x1xf32>
    %326 = vector.broadcast %325 : vector<16x1xf32> to vector<16x32xf32>
    %327 = arith.mulf %322, %326 : vector<16x32xf32>
    %328 = vector.broadcast %307 : vector<1x32xf32> to vector<16x32xf32>
    %329 = arith.mulf %327, %328 : vector<16x32xf32>
    %330 = vector.broadcast %309 : vector<1x32xf32> to vector<16x32xf32>
    %331 = arith.addf %329, %330 : vector<16x32xf32>
    %c0_137 = arith.constant 0 : index
    %c0_138 = arith.constant 0 : index
    %332 = vector.load %arg15[%c0_137, %c0_138] : memref<16x32xf32, #tpu.memory_space<vmem>>, vector<16x32xf32>
    tpu.vector_store %arg15[%c0_137, %c0_138], %331 {strides = array<i32>} : memref<16x32xf32, #tpu.memory_space<vmem>>, vector<16x32xf32>,
    return
  }
  func.func @transform_0(%arg0: i32) -> (i32, i32) {
    %c0_i32 = arith.constant 0 : i32
    %c0_i32_0 = arith.constant 0 : i32
    %c0_i32_1 = arith.constant 0 : i32
    return %c0_i32, %c0_i32_0 : i32, i32
  }
  func.func @transform_1(%arg0: i32) -> (i32, i32) {
    %c0_i32 = arith.constant 0 : i32
    %c0_i32_0 = arith.constant 0 : i32
    %c0_i32_1 = arith.constant 0 : i32
    return %c0_i32, %c0_i32_0 : i32, i32
  }
  func.func @transform_2(%arg0: i32) -> (i32, i32, i32) {
    %c0_i32 = arith.constant 0 : i32
    %c0_i32_0 = arith.constant 0 : i32
    %c0_i32_1 = arith.constant 0 : i32
    %c0_i32_2 = arith.constant 0 : i32
    return %c0_i32, %c0_i32_0, %c0_i32_1 : i32, i32, i32
  }
  func.func @transform_3(%arg0: i32) -> (i32, i32, i32) {
    %c0_i32 = arith.constant 0 : i32
    %c0_i32_0 = arith.constant 0 : i32
    %c0_i32_1 = arith.constant 0 : i32
    %c0_i32_2 = arith.constant 0 : i32
    return %c0_i32, %c0_i32_0, %c0_i32_1 : i32, i32, i32
  }
  func.func @transform_4(%arg0: i32) -> (i32, i32, i32) {
    %c0_i32 = arith.constant 0 : i32
    %c0_i32_0 = arith.constant 0 : i32
    %c0_i32_1 = arith.constant 0 : i32
    %c0_i32_2 = arith.constant 0 : i32
    return %c0_i32, %c0_i32_0, %c0_i32_1 : i32, i32, i32
  }
  func.func @transform_5(%arg0: i32) -> (i32, i32, i32) {
    %c0_i32 = arith.constant 0 : i32
    %c0_i32_0 = arith.constant 0 : i32
    %c0_i32_1 = arith.constant 0 : i32
    %c0_i32_2 = arith.constant 0 : i32
    return %c0_i32, %c0_i32_0, %c0_i32_1 : i32, i32, i32
  }
  func.func @transform_6(%arg0: i32) -> (i32, i32, i32) {
    %c0_i32 = arith.constant 0 : i32
    %c0_i32_0 = arith.constant 0 : i32
    %c0_i32_1 = arith.constant 0 : i32
    %c0_i32_2 = arith.constant 0 : i32
    return %c0_i32, %c0_i32_0, %c0_i32_1 : i32, i32, i32
  }
  func.func @transform_7(%arg0: i32) -> (i32, i32, i32) {
    %c0_i32 = arith.constant 0 : i32
    %c0_i32_0 = arith.constant 0 : i32
    %c0_i32_1 = arith.constant 0 : i32
    %c0_i32_2 = arith.constant 0 : i32
    return %c0_i32, %c0_i32_0, %c0_i32_1 : i32, i32, i32
  }
  func.func @transform_8(%arg0: i32) -> (i32, i32, i32) {
    %c0_i32 = arith.constant 0 : i32
    %c0_i32_0 = arith.constant 0 : i32
    %c0_i32_1 = arith.constant 0 : i32
    %c0_i32_2 = arith.constant 0 : i32
    return %c0_i32, %c0_i32_0, %c0_i32_1 : i32, i32, i32
  }
  func.func @transform_9(%arg0: i32) -> (i32, i32, i32) {
    %c0_i32 = arith.constant 0 : i32
    %c0_i32_0 = arith.constant 0 : i32
    %c0_i32_1 = arith.constant 0 : i32
    %c0_i32_2 = arith.constant 0 : i32
    return %c0_i32, %c0_i32_0, %c0_i32_1 : i32, i32, i32
  }
  func.func @transform_10(%arg0: i32) -> (i32, i32, i32) {
    %c0_i32 = arith.constant 0 : i32
    %c0_i32_0 = arith.constant 0 : i32
    %c0_i32_1 = arith.constant 0 : i32
    %c0_i32_2 = arith.constant 0 : i32
    return %c0_i32, %c0_i32_0, %c0_i32_1 : i32, i32, i32
  }
  func.func @transform_11(%arg0: i32) -> (i32, i32, i32) {
    %c0_i32 = arith.constant 0 : i32
    %c0_i32_0 = arith.constant 0 : i32
    %c0_i32_1 = arith.constant 0 : i32
    %c0_i32_2 = arith.constant 0 : i32
    return %c0_i32, %c0_i32_0, %c0_i32_1 : i32, i32, i32
  }
  func.func @transform_12(%arg0: i32) -> (i32, i32, i32) {
    %c0_i32 = arith.constant 0 : i32
    %c0_i32_0 = arith.constant 0 : i32
    %c0_i32_1 = arith.constant 0 : i32
    %c0_i32_2 = arith.constant 0 : i32
    return %c0_i32, %c0_i32_0, %c0_i32_1 : i32, i32, i32
  }
  func.func @transform_13(%arg0: i32) -> (i32, i32, i32) {
    %c0_i32 = arith.constant 0 : i32
    %c0_i32_0 = arith.constant 0 : i32
    %c0_i32_1 = arith.constant 0 : i32
    %c0_i32_2 = arith.constant 0 : i32
    return %c0_i32, %c0_i32_0, %c0_i32_1 : i32, i32, i32
  }
  func.func @transform_14(%arg0: i32) -> (i32, i32) {
    %c0_i32 = arith.constant 0 : i32
    %c0_i32_0 = arith.constant 0 : i32
    %c0_i32_1 = arith.constant 0 : i32
    return %c0_i32, %c0_i32_0 : i32, i32
  }
}

</mosaic_0001>

<llo_original>
// kernel: transformer_encoder.1
$region0: #{transformer_encoder.1}
  #allocation0 [shape = 'u32[]', space=smem, size = 0x4, offset = 0x4, fixed_abs, tag = 'smem constant byte address 0x4 - core index']
  #allocation1 [shape = 'u32[72,128]{1,0:T(1,128)}', space=vmem, size = 0x9000, scoped, tag = 'internal scratch']
  %s0 = inlined_call_operand.vmem [shape: f32[16,32], index: 0, kind: input, shape index: {}]
  %s1 = inlined_call_operand.vmem [shape: f32[16,16], index: 1, kind: input, shape index: {}]
  %s2 = inlined_call_operand.vmem [shape: bf16[2,32,96], index: 2, kind: input, shape index: {}]
  %s3 = inlined_call_operand.vmem [shape: f32[2,1,96], index: 3, kind: input, shape index: {}]
  %s4 = inlined_call_operand.vmem [shape: bf16[2,32,32], index: 4, kind: input, shape index: {}]
  %s5 = inlined_call_operand.vmem [shape: f32[2,1,32], index: 5, kind: input, shape index: {}]
  %s6 = inlined_call_operand.vmem [shape: f32[2,1,32], index: 6, kind: input, shape index: {}]
  %s7 = inlined_call_operand.vmem [shape: f32[2,1,32], index: 7, kind: input, shape index: {}]
  %s8 = inlined_call_operand.vmem [shape: bf16[2,32,64], index: 8, kind: input, shape index: {}]
  %s9 = inlined_call_operand.vmem [shape: f32[2,1,64], index: 9, kind: input, shape index: {}]
  %s10 = inlined_call_operand.vmem [shape: bf16[2,64,32], index: 10, kind: input, shape index: {}]
  %s11 = inlined_call_operand.vmem [shape: f32[2,1,32], index: 11, kind: input, shape index: {}]
  %s12 = inlined_call_operand.vmem [shape: f32[2,1,32], index: 12, kind: input, shape index: {}]
  %s13 = inlined_call_operand.vmem [shape: f32[2,1,32], index: 13, kind: input, shape index: {}]
  %s14 = inlined_call_operand.hbm [shape: f32[16,32], index: 14, kind: output, shape index: {}]
  %s15 = sld [smem:[#allocation0]]
  $region66: #{transformer_encoder.1} parent=0
    _
  %s17 = ssub.s32 1, %s15
  %s18 = scalar_select 0, %s17, %s15
  $region1: #{transformer_encoder.1} parent=0
    #allocation2 [shape = 'u8[8192]{0}', space=vmem, size = 0x2000, scoped, tag = 'output window, operand 0, single buffered']
    #allocation3 [shape = 's32[1]{0}', space=sflag, size = 0x4, scoped, tag = 'scoped memory for transformer_encoder.1']
    %19 = vsyncpa [#allocation3], 0
    // Predicated region
    $region2: #{transformer_encoder.1} parent=1 // pred_check
      _
    $region3: #{transformer_encoder.1} parent=1 // pred_check_branch
      %21 = sbr.rel (0) target = $region5
    $region4: #{transformer_encoder.1} parent=1 // pred_region
      _
    $region5: #{transformer_encoder.1} parent=1 // pred_fallthru
      _
    // Predicated region
    $region6: #{transformer_encoder.1} parent=1 // pred_check
      _
    $region7: #{transformer_encoder.1} parent=1 // pred_check_branch
      %23 = sbr.rel (0) target = $region9
    $region8: #{transformer_encoder.1} parent=1 // pred_region
      _
    $region9: #{transformer_encoder.1} parent=1 // pred_fallthru
      _
    // Predicated region
    $region10: #{transformer_encoder.1} parent=1 // pred_check
      _
    $region11: #{transformer_encoder.1} parent=1 // pred_check_branch
      %25 = sbr.rel (0) target = $region13
    $region12: #{transformer_encoder.1} parent=1 // pred_region
      _
    $region13: #{transformer_encoder.1} parent=1 // pred_fallthru
      _
    // Predicated region
    $region14: #{transformer_encoder.1} parent=1 // pred_check
      _
    $region15: #{transformer_encoder.1} parent=1 // pred_check_branch
      %27 = sbr.rel (0) target = $region17
    $region16: #{transformer_encoder.1} parent=1 // pred_region
      _
    $region17: #{transformer_encoder.1} parent=1 // pred_fallthru
      _
    // Predicated region
    $region18: #{transformer_encoder.1} parent=1 // pred_check
      _
    $region19: #{transformer_encoder.1} parent=1 // pred_check_branch
      %29 = sbr.rel (0) target = $region21
    $region20: #{transformer_encoder.1} parent=1 // pred_region
      _
    $region21: #{transformer_encoder.1} parent=1 // pred_fallthru
      _
    // Predicated region
    $region22: #{transformer_encoder.1} parent=1 // pred_check
      _
    $region23: #{transformer_encoder.1} parent=1 // pred_check_branch
      %31 = sbr.rel (0) target = $region25
    $region24: #{transformer_encoder.1} parent=1 // pred_region
      _
    $region25: #{transformer_encoder.1} parent=1 // pred_fallthru
      _
    // Predicated region
    $region26: #{transformer_encoder.1} parent=1 // pred_check
      _
    $region27: #{transformer_encoder.1} parent=1 // pred_check_branch
      %33 = sbr.rel (0) target = $region29
    $region28: #{transformer_encoder.1} parent=1 // pred_region
      _
    $region29: #{transformer_encoder.1} parent=1 // pred_fallthru
      _
    // Predicated region
    $region30: #{transformer_encoder.1} parent=1 // pred_check
      _
    $region31: #{transformer_encoder.1} parent=1 // pred_check_branch
      %35 = sbr.rel (0) target = $region33
    $region32: #{transformer_encoder.1} parent=1 // pred_region
      _
    $region33: #{transformer_encoder.1} parent=1 // pred_fallthru
      _
    // Predicated region
    $region34: #{transformer_encoder.1} parent=1 // pred_check
      _
    $region35: #{transformer_encoder.1} parent=1 // pred_check_branch
      %37 = sbr.rel (0) target = $region37
    $region36: #{transformer_encoder.1} parent=1 // pred_region
      _
    $region37: #{transformer_encoder.1} parent=1 // pred_fallthru
      _
    // Predicated region
    $region38: #{transformer_encoder.1} parent=1 // pred_check
      _
    $region39: #{transformer_encoder.1} parent=1 // pred_check_branch
      %39 = sbr.rel (0) target = $region41
    $region40: #{transformer_encoder.1} parent=1 // pred_region
      _
    $region41: #{transformer_encoder.1} parent=1 // pred_fallthru
      _
    // Predicated region
    $region42: #{transformer_encoder.1} parent=1 // pred_check
      _
    $region43: #{transformer_encoder.1} parent=1 // pred_check_branch
      %41 = sbr.rel (0) target = $region45
    $region44: #{transformer_encoder.1} parent=1 // pred_region
      _
    $region45: #{transformer_encoder.1} parent=1 // pred_fallthru
      _
    // Predicated region
    $region46: #{transformer_encoder.1} parent=1 // pred_check
      _
    $region47: #{transformer_encoder.1} parent=1 // pred_check_branch
      %43 = sbr.rel (0) target = $region49
    $region48: #{transformer_encoder.1} parent=1 // pred_region
      _
    $region49: #{transformer_encoder.1} parent=1 // pred_fallthru
      _
    // Predicated region
    $region50: #{transformer_encoder.1} parent=1 // pred_check
      _
    $region51: #{transformer_encoder.1} parent=1 // pred_check_branch
      %45 = sbr.rel (0) target = $region53
    $region52: #{transformer_encoder.1} parent=1 // pred_region
      _
    $region53: #{transformer_encoder.1} parent=1 // pred_fallthru
      _
    // Predicated region
    $region54: #{transformer_encoder.1} parent=1 // pred_check
      _
    $region55: #{transformer_encoder.1} parent=1 // pred_check_branch
      %47 = sbr.rel (0) target = $region57
    $region56: #{transformer_encoder.1} parent=1 // pred_region
      _
    $region57: #{transformer_encoder.1} parent=1 // pred_fallthru
      _
    %v49 = vld [vmem:[%s0] sm:$0xff]
    %v50 = vld [vmem:[%s0 + $0x8] sm:$0xff]
    %v51 = vld [vmem:[%s1] sm:$0xff]
    %v52 = vld [vmem:[%s1 + $0x8] sm:$0xff]
    %v53 = vpack.c.bf16 %v50, %v49
    %v54 = vld [vmem:[%s2] sm:$0xf]
    %v55 = vld [vmem:[%s2 + $0x4] sm:$0xf]
    %v56 = vld [vmem:[%s2 + $0x8] sm:$0xf]
    %v57 = vld [vmem:[%s2 + $0xc] sm:$0xf]
    %v58 = vld [vmem:[%s3] sm:$0x1]
    %v60 = vperm.slane %v58, 0
    %v66 = vunpack.c.l.b16 %v54
    %v67 = vunpack.c.l.b16 %v55
    %v68 = vunpack.c.l.b16 %v56
    %v69 = vunpack.c.l.b16 %v57
    %v70 = vpack.c.b16 %v67, %v66
    %v71 = vpack.c.b16 %v69, %v68
    %vm74 = vcmask 261120
    %v76 = vsel %vm74, %v53, 0
    %78 = vmatpush.bf16.msra.mxu0 0
    %79 = vmatpush.bf16.msra.mxu0 0
    %80 = vmatpush.bf16.msra.mxu0 0
    %81 = vmatpush.bf16.msra.mxu0 0
    %82 = vmatpush.bf16.msra.mxu0 0
    %83 = vmatpush.bf16.msra.mxu0 0
    %84 = vmatpush.bf16.msra.mxu0 %v71
    %85 = vmatpush.bf16.msra.mxu0 %v70
    %86 = vmatmul.bf16.gmra.mxu0 %v76
    %v87 = vpop.f32.mrf.mxu0
    %v88 = vadd.f32 %v60, %v87
    %v89 = vpop.f32.mrf.mxu0
    %v90 = vadd.f32 %v60, %v89
    %91 = vdwg.mxu0
    %v92 = vmul.f32 %v88, 0.35355338
    %v93 = vmul.f32 %v90, 0.35355338
    %v94 = vpack.c.bf16 %v92, %v92
    %v95 = vpack.c.bf16 %v93, %v93
    %v96 = vpack.c.bf16 %v88, %v88
    %v97 = vpack.c.bf16 %v90, %v90
    %v100 = vunpack.c.l.b16 %v94
    %v101 = vunpack.c.l.b16 %v95
    %v102 = vpack.c.b16 %v101, %v100
    %v105 = vunpack.c.l.b16 %v96
    %v106 = vunpack.c.l.b16 %v97
    %v107 = vpack.c.b16 %v106, %v105
    %108 = vrot.lane.b32.xlu0 %v107, 96
    %v109 = vpop.permute.xlu0 %108
    %vm110 = vcmask 64512
    %v112 = vsel %vm110, %v102, 0
    %v115 = vsel %vm110, %v109, 0
    %117 = vmatpush.bf16.xpose.msra.mxu0 0
    %118 = vmatpush.bf16.xpose.msra.mxu0 0
    %119 = vmatpush.bf16.xpose.msra.mxu0 0
    %120 = vmatpush.bf16.xpose.msra.mxu0 0
    %121 = vmatpush.bf16.xpose.msra.mxu0 0
    %122 = vmatpush.bf16.xpose.msra.mxu0 0
    %123 = vmatpush.bf16.xpose.msra.mxu0 0
    %124 = vmatpush.bf16.xpose.msra.mxu0 %v115
    %125 = vmatmul.bf16.gmra.mxu0 %v112
    %v126 = vpop.f32.mrf.mxu0
    %v127 = vadd.f32 %v51, %v126
    %v128 = vpop.f32.mrf.mxu0
    %v129 = vadd.f32 %v52, %v128
    %130 = vdwg.mxu0
    %vm131 = vcmask 130048
    %v132 = vsel %vm131, %v127, -inf
    %133 = vmax.xlane.f32.xlu0 %v132
    %v134 = vpop.xlane.xlu0 %133
    %v135 = vsel %vm131, %v129, -inf
    %136 = vmax.xlane.f32.xlu0 %v135
    %v137 = vpop.xlane.xlu0 %136
    %v138 = vsub.f32 %v127, %v134
    %v139 = vsub.f32 %v129, %v137
    %v140 = vmul.f32 %v138, 1.442695
    %v141 = vpow.pop %v140
    %v142 = vmul.f32 %v139, 1.442695
    %v143 = vpow.pop %v142
    %v144 = vsel %vm131, %v141, 0.0
    %145 = vadd.xlane.f32.xlu0 %v144
    %v146 = vpop.xlane.xlu0 %145
    %v147 = vsel %vm131, %v143, 0.0
    %148 = vadd.xlane.f32.xlu0 %v147
    %v149 = vpop.xlane.xlu0 %148
    %v150 = vrcp.pop %v146
    %v151 = vrcp.pop %v149
    %v152 = vmul.f32 %v141, %v150
    %v153 = vmul.f32 %v143, %v151
    %v154 = vpack.c.bf16 %v153, %v152
    %155 = vrot.lane.b32.xlu0 %v107, 64
    %v156 = vpop.permute.xlu0 %155
    %v159 = vsel %vm131, %v154, 0
    %161 = vmatpush.bf16.msra.mxu0 0
    %162 = vmatpush.bf16.msra.mxu0 0
    %163 = vmatpush.bf16.msra.mxu0 0
    %164 = vmatpush.bf16.msra.mxu0 0
    %165 = vmatpush.bf16.msra.mxu0 0
    %166 = vmatpush.bf16.msra.mxu0 0
    %167 = vmatpush.bf16.msra.mxu0 0
    %168 = vmatpush.bf16.msra.mxu0 %v156
    %169 = vmatmul.bf16.gmra.mxu0 %v159
    %v170 = vpop.f32.mrf.mxu0
    %v171 = vadd.f32 0.0, %v170
    %v172 = vpop.f32.mrf.mxu0
    %v173 = vadd.f32 0.0, %v172
    %174 = vdwg.mxu0
    %175 = vrot.lane.b32.xlu0 %v102, 120
    %v176 = vpop.permute.xlu0 %175
    %177 = vrot.lane.b32.xlu0 %v107, 88
    %v178 = vpop.permute.xlu0 %177
    %v180 = vsel %vm110, %v176, 0
    %v183 = vsel %vm110, %v178, 0
    %185 = vmatpush.bf16.xpose.msra.mxu0 0
    %186 = vmatpush.bf16.xpose.msra.mxu0 0
    %187 = vmatpush.bf16.xpose.msra.mxu0 0
    %188 = vmatpush.bf16.xpose.msra.mxu0 0
    %189 = vmatpush.bf16.xpose.msra.mxu0 0
    %190 = vmatpush.bf16.xpose.msra.mxu0 0
    %191 = vmatpush.bf16.xpose.msra.mxu0 0
    %192 = vmatpush.bf16.xpose.msra.mxu0 %v183
    %193 = vmatmul.bf16.gmra.mxu0 %v180
    %v194 = vpop.f32.mrf.mxu0
    %v195 = vadd.f32 %v51, %v194
    %v196 = vpop.f32.mrf.mxu0
    %v197 = vadd.f32 %v52, %v196
    %198 = vdwg.mxu0
    %v199 = vsel %vm131, %v195, -inf
    %200 = vmax.xlane.f32.xlu0 %v199
    %v201 = vpop.xlane.xlu0 %200
    %v202 = vsel %vm131, %v197, -inf
    %203 = vmax.xlane.f32.xlu0 %v202
    %v204 = vpop.xlane.xlu0 %203
    %v205 = vsub.f32 %v195, %v201
    %v206 = vsub.f32 %v197, %v204
    %v207 = vmul.f32 %v205, 1.442695
    %v208 = vpow.pop %v207
    %v209 = vmul.f32 %v206, 1.442695
    %v210 = vpow.pop %v209
    %v211 = vsel %vm131, %v208, 0.0
    %212 = vadd.xlane.f32.xlu0 %v211
    %v213 = vpop.xlane.xlu0 %212
    %v214 = vsel %vm131, %v210, 0.0
    %215 = vadd.xlane.f32.xlu0 %v214
    %v216 = vpop.xlane.xlu0 %215
    %v217 = vrcp.pop %v213
    %v218 = vrcp.pop %v216
    %v219 = vmul.f32 %v208, %v217
    %v220 = vmul.f32 %v210, %v218
    %v221 = vpack.c.bf16 %v220, %v219
    %222 = vrot.lane.b32.xlu0 %v107, 56
    %v223 = vpop.permute.xlu0 %222
    %v226 = vsel %vm131, %v221, 0
    %228 = vmatpush.bf16.msra.mxu0 0
    %229 = vmatpush.bf16.msra.mxu0 0
    %230 = vmatpush.bf16.msra.mxu0 0
    %231 = vmatpush.bf16.msra.mxu0 0
    %232 = vmatpush.bf16.msra.mxu0 0
    %233 = vmatpush.bf16.msra.mxu0 0
    %234 = vmatpush.bf16.msra.mxu0 0
    %235 = vmatpush.bf16.msra.mxu0 %v223
    %236 = vmatmul.bf16.gmra.mxu0 %v226
    %v237 = vpop.f32.mrf.mxu0
    %v238 = vadd.f32 0.0, %v237
    %v239 = vpop.f32.mrf.mxu0
    %v240 = vadd.f32 0.0, %v239
    %241 = vdwg.mxu0
    %242 = vrot.lane.b32.xlu0 %v102, 112
    %v243 = vpop.permute.xlu0 %242
    %244 = vrot.lane.b32.xlu0 %v107, 80
    %v245 = vpop.permute.xlu0 %244
    %v247 = vsel %vm110, %v243, 0
    %v250 = vsel %vm110, %v245, 0
    %252 = vmatpush.bf16.xpose.msra.mxu0 0
    %253 = vmatpush.bf16.xpose.msra.mxu0 0
    %254 = vmatpush.bf16.xpose.msra.mxu0 0
    %255 = vmatpush.bf16.xpose.msra.mxu0 0
    %256 = vmatpush.bf16.xpose.msra.mxu0 0
    %257 = vmatpush.bf16.xpose.msra.mxu0 0
    %258 = vmatpush.bf16.xpose.msra.mxu0 0
    %259 = vmatpush.bf16.xpose.msra.mxu0 %v250
    %260 = vmatmul.bf16.gmra.mxu0 %v247
    %v261 = vpop.f32.mrf.mxu0
    %v262 = vadd.f32 %v51, %v261
    %v263 = vpop.f32.mrf.mxu0
    %v264 = vadd.f32 %v52, %v263
    %265 = vdwg.mxu0
    %v266 = vsel %vm131, %v262, -inf
    %267 = vmax.xlane.f32.xlu0 %v266
    %v268 = vpop.xlane.xlu0 %267
    %v269 = vsel %vm131, %v264, -inf
    %270 = vmax.xlane.f32.xlu0 %v269
    %v271 = vpop.xlane.xlu0 %270
    %v272 = vsub.f32 %v262, %v268
    %v273 = vsub.f32 %v264, %v271
    %v274 = vmul.f32 %v272, 1.442695
    %v275 = vpow.pop %v274
    %v276 = vmul.f32 %v273, 1.442695
    %v277 = vpow.pop %v276
    %v278 = vsel %vm131, %v275, 0.0
    %279 = vadd.xlane.f32.xlu0 %v278
    %v280 = vpop.xlane.xlu0 %279
    %v281 = vsel %vm131, %v277, 0.0
    %282 = vadd.xlane.f32.xlu0 %v281
    %v283 = vpop.xlane.xlu0 %282
    %v284 = vrcp.pop %v280
    %v285 = vrcp.pop %v283
    %v286 = vmul.f32 %v275, %v284
    %v287 = vmul.f32 %v277, %v285
    %v288 = vpack.c.bf16 %v287, %v286
    %289 = vrot.lane.b32.xlu0 %v107, 48
    %v290 = vpop.permute.xlu0 %289
    %v293 = vsel %vm131, %v288, 0
    %295 = vmatpush.bf16.msra.mxu0 0
    %296 = vmatpush.bf16.msra.mxu0 0
    %297 = vmatpush.bf16.msra.mxu0 0
    %298 = vmatpush.bf16.msra.mxu0 0
    %299 = vmatpush.bf16.msra.mxu0 0
    %300 = vmatpush.bf16.msra.mxu0 0
    %301 = vmatpush.bf16.msra.mxu0 0
    %302 = vmatpush.bf16.msra.mxu0 %v290
    %303 = vmatmul.bf16.gmra.mxu0 %v293
    %v304 = vpop.f32.mrf.mxu0
    %v305 = vadd.f32 0.0, %v304
    %v306 = vpop.f32.mrf.mxu0
    %v307 = vadd.f32 0.0, %v306
    %308 = vdwg.mxu0
    %309 = vrot.lane.b32.xlu0 %v102, 104
    %v310 = vpop.permute.xlu0 %309
    %311 = vrot.lane.b32.xlu0 %v107, 72
    %v312 = vpop.permute.xlu0 %311
    %v314 = vsel %vm110, %v310, 0
    %v317 = vsel %vm110, %v312, 0
    %319 = vmatpush.bf16.xpose.msra.mxu0 0
    %320 = vmatpush.bf16.xpose.msra.mxu0 0
    %321 = vmatpush.bf16.xpose.msra.mxu0 0
    %322 = vmatpush.bf16.xpose.msra.mxu0 0
    %323 = vmatpush.bf16.xpose.msra.mxu0 0
    %324 = vmatpush.bf16.xpose.msra.mxu0 0
    %325 = vmatpush.bf16.xpose.msra.mxu0 0
    %326 = vmatpush.bf16.xpose.msra.mxu0 %v317
    %327 = vmatmul.bf16.gmra.mxu0 %v314
    %v328 = vpop.f32.mrf.mxu0
    %v329 = vadd.f32 %v51, %v328
    %v330 = vpop.f32.mrf.mxu0
    %v331 = vadd.f32 %v52, %v330
    %332 = vdwg.mxu0
    %v333 = vsel %vm131, %v329, -inf
    %334 = vmax.xlane.f32.xlu0 %v333
    %v335 = vpop.xlane.xlu0 %334
    %v336 = vsel %vm131, %v331, -inf
    %337 = vmax.xlane.f32.xlu0 %v336
    %v338 = vpop.xlane.xlu0 %337
    %v339 = vsub.f32 %v329, %v335
    %v340 = vsub.f32 %v331, %v338
    %v341 = vmul.f32 %v339, 1.442695
    %v342 = vpow.pop %v341
    %v343 = vmul.f32 %v340, 1.442695
    %v344 = vpow.pop %v343
    %v345 = vsel %vm131, %v342, 0.0
    %346 = vadd.xlane.f32.xlu0 %v345
    %v347 = vpop.xlane.xlu0 %346
    %v348 = vsel %vm131, %v344, 0.0
    %349 = vadd.xlane.f32.xlu0 %v348
    %v350 = vpop.xlane.xlu0 %349
    %v351 = vrcp.pop %v347
    %v352 = vrcp.pop %v350
    %v353 = vmul.f32 %v342, %v351
    %v354 = vmul.f32 %v344, %v352
    %v355 = vpack.c.bf16 %v354, %v353
    %356 = vrot.lane.b32.xlu0 %v107, 40
    %v357 = vpop.permute.xlu0 %356
    %v360 = vsel %vm131, %v355, 0
    %362 = vmatpush.bf16.msra.mxu0 0
    %363 = vmatpush.bf16.msra.mxu0 0
    %364 = vmatpush.bf16.msra.mxu0 0
    %365 = vmatpush.bf16.msra.mxu0 0
    %366 = vmatpush.bf16.msra.mxu0 0
    %367 = vmatpush.bf16.msra.mxu0 0
    %368 = vmatpush.bf16.msra.mxu0 0
    %369 = vmatpush.bf16.msra.mxu0 %v357
    %370 = vmatmul.bf16.gmra.mxu0 %v360
    %v371 = vpop.f32.mrf.mxu0
    %v372 = vadd.f32 0.0, %v371
    %v373 = vpop.f32.mrf.mxu0
    %v374 = vadd.f32 0.0, %v373
    %375 = vdwg.mxu0
    %378 = vrot.lane.b32.xlu0 %v238, 8
    %v379 = vpop.permute.xlu0 %378
    %380 = vrot.lane.b32.xlu0 %v240, 8
    %v381 = vpop.permute.xlu0 %380
    %386 = vrot.lane.b32.xlu0 %v305, 16
    %v387 = vpop.permute.xlu0 %386
    %388 = vrot.lane.b32.xlu0 %v307, 16
    %v389 = vpop.permute.xlu0 %388
    %394 = vrot.lane.b32.xlu0 %v372, 24
    %v395 = vpop.permute.xlu0 %394
    %396 = vrot.lane.b32.xlu0 %v374, 24
    %v397 = vpop.permute.xlu0 %396
    %v400 = vsel %vm110, %v171, %v379
    %v401 = vsel %vm110, %v173, %v381
    %v402 = vsel %vm131, %v400, %v387
    %v403 = vsel %vm131, %v401, %v389
    %vm404 = vcmask 195584
    %v405 = vsel %vm404, %v402, %v395
    %v406 = vsel %vm404, %v403, %v397
    %v407 = vpack.c.bf16 %v406, %v405
    %v408 = vld [vmem:[%s4] sm:$0xf]
    %v409 = vld [vmem:[%s4 + $0x4] sm:$0xf]
    %v410 = vld [vmem:[%s4 + $0x8] sm:$0xf]
    %v411 = vld [vmem:[%s4 + $0xc] sm:$0xf]
    %v412 = vld [vmem:[%s5] sm:$0x1]
    %v414 = vperm.slane %v412, 0
    %v420 = vunpack.c.l.b16 %v408
    %v421 = vunpack.c.l.b16 %v409
    %v422 = vunpack.c.l.b16 %v410
    %v423 = vunpack.c.l.b16 %v411
    %v424 = vpack.c.b16 %v421, %v420
    %v425 = vpack.c.b16 %v423, %v422
    %v429 = vsel %vm74, %v407, 0
    %431 = vmatpush.bf16.msra.mxu0 0
    %432 = vmatpush.bf16.msra.mxu0 0
    %433 = vmatpush.bf16.msra.mxu0 0
    %434 = vmatpush.bf16.msra.mxu0 0
    %435 = vmatpush.bf16.msra.mxu0 0
    %436 = vmatpush.bf16.msra.mxu0 0
    %437 = vmatpush.bf16.msra.mxu0 %v425
    %438 = vmatpush.bf16.msra.mxu0 %v424
    %439 = vmatmul.bf16.gmra.mxu0 %v429
    %v440 = vpop.f32.mrf.mxu0
    %v441 = vadd.f32 %v414, %v440
    %v442 = vpop.f32.mrf.mxu0
    %v443 = vadd.f32 %v414, %v442
    %444 = vdwg.mxu0
    %v445 = vadd.f32 %v49, %v441
    %v446 = vadd.f32 %v50, %v443
    %v447 = vld [vmem:[%s6] sm:$0x1]
    %v448 = vld [vmem:[%s7] sm:$0x1]
    %v449 = vsel %vm74, %v445, 0.0
    %450 = vadd.xlane.f32.xlu0 %v449
    %v451 = vpop.xlane.xlu0 %450
    %v452 = vsel %vm74, %v446, 0.0
    %453 = vadd.xlane.f32.xlu0 %v452
    %v454 = vpop.xlane.xlu0 %453
    %v455 = vrcp.pop 32.0
    %v456 = vmul.f32 32.0, %v455
    %v457 = vsub.f32 1.0, %v456
    %v458 = vmul.f32 %v455, %v457
    %v459 = vadd.f32 %v455, %v458
    %vm460 = vweird.f32 %v455
    %v461 = vsel %vm460, %v455, %v459
    %v462 = vmul.f32 %v451, %v461
    %v463 = vmul.f32 %v454, %v461
    %v464 = vsub.f32 %v445, %v462
    %v465 = vsub.f32 %v446, %v463
    %v466 = vmul.f32 %v464, %v464
    %v467 = vmul.f32 %v465, %v465
    %v468 = vsel %vm74, %v466, 0.0
    %469 = vadd.xlane.f32.xlu0 %v468
    %v470 = vpop.xlane.xlu0 %469
    %v471 = vsel %vm74, %v467, 0.0
    %472 = vadd.xlane.f32.xlu0 %v471
    %v473 = vpop.xlane.xlu0 %472
    %v474 = vmul.f32 %v470, %v461
    %v475 = vmul.f32 %v473, %v461
    %v476 = vadd.f32 %v474, 1e-05
    %v477 = vadd.f32 %v475, 1e-05
    %v478 = vrsqrt.pop %v476
    %v479 = vmul.f32 %v478, %v476
    %v480 = vmul.f32 %v479, %v478
    %v481 = vmul.f32 0.5, %v480
    %v482 = vsub.f32 1.5, %v481
    %v483 = vmul.f32 %v478, %v482
    %vm484 = vweird.f32 %v476
    %vm485 = vweird.f32 %v478
    %vm486 = vmor %vm484, %vm485
    %v487 = vsel %vm486, %v478, %v483
    %v488 = vrsqrt.pop %v477
    %v489 = vmul.f32 %v488, %v477
    %v490 = vmul.f32 %v489, %v488
    %v491 = vmul.f32 0.5, %v490
    %v492 = vsub.f32 1.5, %v491
    %v493 = vmul.f32 %v488, %v492
    %vm494 = vweird.f32 %v477
    %vm495 = vweird.f32 %v488
    %vm496 = vmor %vm494, %vm495
    %v497 = vsel %vm496, %v488, %v493
    %v498 = vmul.f32 %v464, %v487
    %v499 = vmul.f32 %v465, %v497
    %v501 = vperm.slane %v447, 0
    %v503 = vmul.f32 %v498, %v501
    %v504 = vmul.f32 %v499, %v501
    %v506 = vperm.slane %v448, 0
    %v508 = vadd.f32 %v503, %v506
    %v509 = vadd.f32 %v504, %v506
    %v510 = vpack.c.bf16 %v509, %v508
    %v511 = vld [vmem:[%s8] sm:$0xf]
    %v512 = vld [vmem:[%s8 + $0x4] sm:$0xf]
    %v513 = vld [vmem:[%s8 + $0x8] sm:$0xf]
    %v514 = vld [vmem:[%s8 + $0xc] sm:$0xf]
    %v515 = vld [vmem:[%s9] sm:$0x1]
    %v517 = vperm.slane %v515, 0
    %v523 = vunpack.c.l.b16 %v511
    %v524 = vunpack.c.l.b16 %v512
    %v525 = vunpack.c.l.b16 %v513
    %v526 = vunpack.c.l.b16 %v514
    %v527 = vpack.c.b16 %v524, %v523
    %v528 = vpack.c.b16 %v526, %v525
    %v532 = vsel %vm74, %v510, 0
    %534 = vmatpush.bf16.msra.mxu0 0
    %535 = vmatpush.bf16.msra.mxu0 0
    %536 = vmatpush.bf16.msra.mxu0 0
    %537 = vmatpush.bf16.msra.mxu0 0
    %538 = vmatpush.bf16.msra.mxu0 0
    %539 = vmatpush.bf16.msra.mxu0 0
    %540 = vmatpush.bf16.msra.mxu0 %v528
    %541 = vmatpush.bf16.msra.mxu0 %v527
    %542 = vmatmul.bf16.gmra.mxu0 %v532
    %v543 = vpop.f32.mrf.mxu0
    %v544 = vadd.f32 %v517, %v543
    %v545 = vpop.f32.mrf.mxu0
    %v546 = vadd.f32 %v517, %v545
    %547 = vdwg.mxu0
    %v548 = vmax.f32 %v544, 0.0
    %v549 = vmax.f32 %v546, 0.0
    %v550 = vpack.c.bf16 %v549, %v548
    %v551 = vld [vmem:[%s10] sm:$0xf]
    %v552 = vld [vmem:[%s10 + $0x4] sm:$0xf]
    %v553 = vld [vmem:[%s10 + $0x8] sm:$0xf]
    %v554 = vld [vmem:[%s10 + $0xc] sm:$0xf]
    %v555 = vld [vmem:[%s10 + $0x10] sm:$0xf]
    %v556 = vld [vmem:[%s10 + $0x14] sm:$0xf]
    %v557 = vld [vmem:[%s10 + $0x18] sm:$0xf]
    %v558 = vld [vmem:[%s10 + $0x1c] sm:$0xf]
    %v559 = vld [vmem:[%s11] sm:$0x1]
    %v561 = vperm.slane %v559, 0
    %v571 = vunpack.c.l.b16 %v551
    %v572 = vunpack.c.l.b16 %v552
    %v573 = vunpack.c.l.b16 %v553
    %v574 = vunpack.c.l.b16 %v554
    %v575 = vunpack.c.l.b16 %v555
    %v576 = vunpack.c.l.b16 %v556
    %v577 = vunpack.c.l.b16 %v557
    %v578 = vunpack.c.l.b16 %v558
    %v579 = vpack.c.b16 %v572, %v571
    %v580 = vpack.c.b16 %v574, %v573
    %v581 = vpack.c.b16 %v576, %v575
    %v582 = vpack.c.b16 %v578, %v577
    %vm587 = vcmask 523264
    %v589 = vsel %vm587, %v550, 0
    %591 = vmatpush.bf16.msra.mxu0 0
    %592 = vmatpush.bf16.msra.mxu0 0
    %593 = vmatpush.bf16.msra.mxu0 0
    %594 = vmatpush.bf16.msra.mxu0 0
    %595 = vmatpush.bf16.msra.mxu0 %v582
    %596 = vmatpush.bf16.msra.mxu0 %v581
    %597 = vmatpush.bf16.msra.mxu0 %v580
    %598 = vmatpush.bf16.msra.mxu0 %v579
    %599 = vmatmul.bf16.gmra.mxu0 %v589
    %v600 = vpop.f32.mrf.mxu0
    %v601 = vadd.f32 %v561, %v600
    %v602 = vpop.f32.mrf.mxu0
    %v603 = vadd.f32 %v561, %v602
    %604 = vdwg.mxu0
    %v605 = vadd.f32 %v508, %v601
    %v606 = vadd.f32 %v509, %v603
    %v607 = vld [vmem:[%s12] sm:$0x1]
    %v608 = vld [vmem:[%s13] sm:$0x1]
    %v609 = vsel %vm74, %v605, 0.0
    %610 = vadd.xlane.f32.xlu0 %v609
    %v611 = vpop.xlane.xlu0 %610
    %v612 = vsel %vm74, %v606, 0.0
    %613 = vadd.xlane.f32.xlu0 %v612
    %v614 = vpop.xlane.xlu0 %613
    %v615 = vmul.f32 %v611, %v461
    %v616 = vmul.f32 %v614, %v461
    %v617 = vsub.f32 %v605, %v615
    %v618 = vsub.f32 %v606, %v616
    %v619 = vmul.f32 %v617, %v617
    %v620 = vmul.f32 %v618, %v618
    %v621 = vsel %vm74, %v619, 0.0
    %622 = vadd.xlane.f32.xlu0 %v621
    %v623 = vpop.xlane.xlu0 %622
    %v624 = vsel %vm74, %v620, 0.0
    %625 = vadd.xlane.f32.xlu0 %v624
    %v626 = vpop.xlane.xlu0 %625
    %v627 = vmul.f32 %v623, %v461
    %v628 = vmul.f32 %v626, %v461
    %v629 = vadd.f32 %v627, 1e-05
    %v630 = vadd.f32 %v628, 1e-05
    %v631 = vrsqrt.pop %v629
    %v632 = vmul.f32 %v631, %v629
    %v633 = vmul.f32 %v632, %v631
    %v634 = vmul.f32 0.5, %v633
    %v635 = vsub.f32 1.5, %v634
    %v636 = vmul.f32 %v631, %v635
    %vm637 = vweird.f32 %v629
    %vm638 = vweird.f32 %v631
    %vm639 = vmor %vm637, %vm638
    %v640 = vsel %vm639, %v631, %v636
    %v641 = vrsqrt.pop %v630
    %v642 = vmul.f32 %v641, %v630
    %v643 = vmul.f32 %v642, %v641
    %v644 = vmul.f32 0.5, %v643
    %v645 = vsub.f32 1.5, %v644
    %v646 = vmul.f32 %v641, %v645
    %vm647 = vweird.f32 %v630
    %vm648 = vweird.f32 %v641
    %vm649 = vmor %vm647, %vm648
    %v650 = vsel %vm649, %v641, %v646
    %v651 = vmul.f32 %v617, %v640
    %v652 = vmul.f32 %v618, %v650
    %v654 = vperm.slane %v607, 0
    %v656 = vmul.f32 %v651, %v654
    %v657 = vmul.f32 %v652, %v654
    %v659 = vperm.slane %v608, 0
    %v661 = vadd.f32 %v656, %v659
    %v662 = vadd.f32 %v657, %v659
    %v663 = vpack.c.bf16 %v662, %v661
    %s664 = scalar_lea.vmem %s2, 16
    %v665 = vld [vmem:[%s664] sm:$0xf]
    %v666 = vld [vmem:[%s664 + $0x4] sm:$0xf]
    %v667 = vld [vmem:[%s664 + $0x8] sm:$0xf]
    %v668 = vld [vmem:[%s664 + $0xc] sm:$0xf]
    %s669 = scalar_lea.vmem %s3, 1
    %v670 = vld [vmem:[%s669] sm:$0x1]
    %v672 = vperm.slane %v670, 0
    %v678 = vunpack.c.l.b16 %v665
    %v679 = vunpack.c.l.b16 %v666
    %v680 = vunpack.c.l.b16 %v667
    %v681 = vunpack.c.l.b16 %v668
    %v682 = vpack.c.b16 %v679, %v678
    %v683 = vpack.c.b16 %v681, %v680
    %v687 = vsel %vm74, %v663, 0
    %689 = vmatpush.bf16.msra.mxu0 0
    %690 = vmatpush.bf16.msra.mxu0 0
    %691 = vmatpush.bf16.msra.mxu0 0
    %692 = vmatpush.bf16.msra.mxu0 0
    %693 = vmatpush.bf16.msra.mxu0 0
    %694 = vmatpush.bf16.msra.mxu0 0
    %695 = vmatpush.bf16.msra.mxu0 %v683
    %696 = vmatpush.bf16.msra.mxu0 %v682
    %697 = vmatmul.bf16.gmra.mxu0 %v687
    %v698 = vpop.f32.mrf.mxu0
    %v699 = vadd.f32 %v672, %v698
    %v700 = vpop.f32.mrf.mxu0
    %v701 = vadd.f32 %v672, %v700
    %702 = vdwg.mxu0
    %v703 = vmul.f32 %v699, 0.35355338
    %v704 = vmul.f32 %v701, 0.35355338
    %v705 = vpack.c.bf16 %v703, %v703
    %v706 = vpack.c.bf16 %v704, %v704
    %v707 = vpack.c.bf16 %v699, %v699
    %v708 = vpack.c.bf16 %v701, %v701
    %v711 = vunpack.c.l.b16 %v705
    %v712 = vunpack.c.l.b16 %v706
    %v713 = vpack.c.b16 %v712, %v711
    %v716 = vunpack.c.l.b16 %v707
    %v717 = vunpack.c.l.b16 %v708
    %v718 = vpack.c.b16 %v717, %v716
    %719 = vrot.lane.b32.xlu0 %v718, 96
    %v720 = vpop.permute.xlu0 %719
    %v722 = vsel %vm110, %v713, 0
    %v725 = vsel %vm110, %v720, 0
    %727 = vmatpush.bf16.xpose.msra.mxu0 0
    %728 = vmatpush.bf16.xpose.msra.mxu0 0
    %729 = vmatpush.bf16.xpose.msra.mxu0 0
    %730 = vmatpush.bf16.xpose.msra.mxu0 0
    %731 = vmatpush.bf16.xpose.msra.mxu0 0
    %732 = vmatpush.bf16.xpose.msra.mxu0 0
    %733 = vmatpush.bf16.xpose.msra.mxu0 0
    %734 = vmatpush.bf16.xpose.msra.mxu0 %v725
    %735 = vmatmul.bf16.gmra.mxu0 %v722
    %v736 = vpop.f32.mrf.mxu0
    %v737 = vadd.f32 %v51, %v736
    %v738 = vpop.f32.mrf.mxu0
    %v739 = vadd.f32 %v52, %v738
    %740 = vdwg.mxu0
    %v741 = vsel %vm131, %v737, -inf
    %742 = vmax.xlane.f32.xlu0 %v741
    %v743 = vpop.xlane.xlu0 %742
    %v744 = vsel %vm131, %v739, -inf
    %745 = vmax.xlane.f32.xlu0 %v744
    %v746 = vpop.xlane.xlu0 %745
    %v747 = vsub.f32 %v737, %v743
    %v748 = vsub.f32 %v739, %v746
    %v749 = vmul.f32 %v747, 1.442695
    %v750 = vpow.pop %v749
    %v751 = vmul.f32 %v748, 1.442695
    %v752 = vpow.pop %v751
    %v753 = vsel %vm131, %v750, 0.0
    %754 = vadd.xlane.f32.xlu0 %v753
    %v755 = vpop.xlane.xlu0 %754
    %v756 = vsel %vm131, %v752, 0.0
    %757 = vadd.xlane.f32.xlu0 %v756
    %v758 = vpop.xlane.xlu0 %757
    %v759 = vrcp.pop %v755
    %v760 = vrcp.pop %v758
    %v761 = vmul.f32 %v750, %v759
    %v762 = vmul.f32 %v752, %v760
    %v763 = vpack.c.bf16 %v762, %v761
    %764 = vrot.lane.b32.xlu0 %v718, 64
    %v765 = vpop.permute.xlu0 %764
    %v768 = vsel %vm131, %v763, 0
    %770 = vmatpush.bf16.msra.mxu0 0
    %771 = vmatpush.bf16.msra.mxu0 0
    %772 = vmatpush.bf16.msra.mxu0 0
    %773 = vmatpush.bf16.msra.mxu0 0
    %774 = vmatpush.bf16.msra.mxu0 0
    %775 = vmatpush.bf16.msra.mxu0 0
    %776 = vmatpush.bf16.msra.mxu0 0
    %777 = vmatpush.bf16.msra.mxu0 %v765
    %778 = vmatmul.bf16.gmra.mxu0 %v768
    %v779 = vpop.f32.mrf.mxu0
    %v780 = vadd.f32 0.0, %v779
    %v781 = vpop.f32.mrf.mxu0
    %v782 = vadd.f32 0.0, %v781
    %783 = vdwg.mxu0
    %784 = vrot.lane.b32.xlu0 %v713, 120
    %v785 = vpop.permute.xlu0 %784
    %786 = vrot.lane.b32.xlu0 %v718, 88
    %v787 = vpop.permute.xlu0 %786
    %v789 = vsel %vm110, %v785, 0
    %v792 = vsel %vm110, %v787, 0
    %794 = vmatpush.bf16.xpose.msra.mxu0 0
    %795 = vmatpush.bf16.xpose.msra.mxu0 0
    %796 = vmatpush.bf16.xpose.msra.mxu0 0
    %797 = vmatpush.bf16.xpose.msra.mxu0 0
    %798 = vmatpush.bf16.xpose.msra.mxu0 0
    %799 = vmatpush.bf16.xpose.msra.mxu0 0
    %800 = vmatpush.bf16.xpose.msra.mxu0 0
    %801 = vmatpush.bf16.xpose.msra.mxu0 %v792
    %802 = vmatmul.bf16.gmra.mxu0 %v789
    %v803 = vpop.f32.mrf.mxu0
    %v804 = vadd.f32 %v51, %v803
    %v805 = vpop.f32.mrf.mxu0
    %v806 = vadd.f32 %v52, %v805
    %807 = vdwg.mxu0
    %v808 = vsel %vm131, %v804, -inf
    %809 = vmax.xlane.f32.xlu0 %v808
    %v810 = vpop.xlane.xlu0 %809
    %v811 = vsel %vm131, %v806, -inf
    %812 = vmax.xlane.f32.xlu0 %v811
    %v813 = vpop.xlane.xlu0 %812
    %v814 = vsub.f32 %v804, %v810
    %v815 = vsub.f32 %v806, %v813
    %v816 = vmul.f32 %v814, 1.442695
    %v817 = vpow.pop %v816
    %v818 = vmul.f32 %v815, 1.442695
    %v819 = vpow.pop %v818
    %v820 = vsel %vm131, %v817, 0.0
    %821 = vadd.xlane.f32.xlu0 %v820
    %v822 = vpop.xlane.xlu0 %821
    %v823 = vsel %vm131, %v819, 0.0
    %824 = vadd.xlane.f32.xlu0 %v823
    %v825 = vpop.xlane.xlu0 %824
    %v826 = vrcp.pop %v822
    %v827 = vrcp.pop %v825
    %v828 = vmul.f32 %v817, %v826
    %v829 = vmul.f32 %v819, %v827
    %v830 = vpack.c.bf16 %v829, %v828
    %831 = vrot.lane.b32.xlu0 %v718, 56
    %v832 = vpop.permute.xlu0 %831
    %v835 = vsel %vm131, %v830, 0
    %837 = vmatpush.bf16.msra.mxu0 0
    %838 = vmatpush.bf16.msra.mxu0 0
    %839 = vmatpush.bf16.msra.mxu0 0
    %840 = vmatpush.bf16.msra.mxu0 0
    %841 = vmatpush.bf16.msra.mxu0 0
    %842 = vmatpush.bf16.msra.mxu0 0
    %843 = vmatpush.bf16.msra.mxu0 0
    %844 = vmatpush.bf16.msra.mxu0 %v832
    %845 = vmatmul.bf16.gmra.mxu0 %v835
    %v846 = vpop.f32.mrf.mxu0
    %v847 = vadd.f32 0.0, %v846
    %v848 = vpop.f32.mrf.mxu0
    %v849 = vadd.f32 0.0, %v848
    %850 = vdwg.mxu0
    %851 = vrot.lane.b32.xlu0 %v713, 112
    %v852 = vpop.permute.xlu0 %851
    %853 = vrot.lane.b32.xlu0 %v718, 80
    %v854 = vpop.permute.xlu0 %853
    %v856 = vsel %vm110, %v852, 0
    %v859 = vsel %vm110, %v854, 0
    %861 = vmatpush.bf16.xpose.msra.mxu0 0
    %862 = vmatpush.bf16.xpose.msra.mxu0 0
    %863 = vmatpush.bf16.xpose.msra.mxu0 0
    %864 = vmatpush.bf16.xpose.msra.mxu0 0
    %865 = vmatpush.bf16.xpose.msra.mxu0 0
    %866 = vmatpush.bf16.xpose.msra.mxu0 0
    %867 = vmatpush.bf16.xpose.msra.mxu0 0
    %868 = vmatpush.bf16.xpose.msra.mxu0 %v859
    %869 = vmatmul.bf16.gmra.mxu0 %v856
    %v870 = vpop.f32.mrf.mxu0
    %v871 = vadd.f32 %v51, %v870
    %v872 = vpop.f32.mrf.mxu0
    %v873 = vadd.f32 %v52, %v872
    %874 = vdwg.mxu0
    %v875 = vsel %vm131, %v871, -inf
    %876 = vmax.xlane.f32.xlu0 %v875
    %v877 = vpop.xlane.xlu0 %876
    %v878 = vsel %vm131, %v873, -inf
    %879 = vmax.xlane.f32.xlu0 %v878
    %v880 = vpop.xlane.xlu0 %879
    %v881 = vsub.f32 %v871, %v877
    %v882 = vsub.f32 %v873, %v880
    %v883 = vmul.f32 %v881, 1.442695
    %v884 = vpow.pop %v883
    %v885 = vmul.f32 %v882, 1.442695
    %v886 = vpow.pop %v885
    %v887 = vsel %vm131, %v884, 0.0
    %888 = vadd.xlane.f32.xlu0 %v887
    %v889 = vpop.xlane.xlu0 %888
    %v890 = vsel %vm131, %v886, 0.0
    %891 = vadd.xlane.f32.xlu0 %v890
    %v892 = vpop.xlane.xlu0 %891
    %v893 = vrcp.pop %v889
    %v894 = vrcp.pop %v892
    %v895 = vmul.f32 %v884, %v893
    %v896 = vmul.f32 %v886, %v894
    %v897 = vpack.c.bf16 %v896, %v895
    %898 = vrot.lane.b32.xlu0 %v718, 48
    %v899 = vpop.permute.xlu0 %898
    %v902 = vsel %vm131, %v897, 0
    %904 = vmatpush.bf16.msra.mxu0 0
    %905 = vmatpush.bf16.msra.mxu0 0
    %906 = vmatpush.bf16.msra.mxu0 0
    %907 = vmatpush.bf16.msra.mxu0 0
    %908 = vmatpush.bf16.msra.mxu0 0
    %909 = vmatpush.bf16.msra.mxu0 0
    %910 = vmatpush.bf16.msra.mxu0 0
    %911 = vmatpush.bf16.msra.mxu0 %v899
    %912 = vmatmul.bf16.gmra.mxu0 %v902
    %v913 = vpop.f32.mrf.mxu0
    %v914 = vadd.f32 0.0, %v913
    %v915 = vpop.f32.mrf.mxu0
    %v916 = vadd.f32 0.0, %v915
    %917 = vdwg.mxu0
    %918 = vrot.lane.b32.xlu0 %v713, 104
    %v919 = vpop.permute.xlu0 %918
    %920 = vrot.lane.b32.xlu0 %v718, 72
    %v921 = vpop.permute.xlu0 %920
    %v923 = vsel %vm110, %v919, 0
    %v926 = vsel %vm110, %v921, 0
    %928 = vmatpush.bf16.xpose.msra.mxu0 0
    %929 = vmatpush.bf16.xpose.msra.mxu0 0
    %930 = vmatpush.bf16.xpose.msra.mxu0 0
    %931 = vmatpush.bf16.xpose.msra.mxu0 0
    %932 = vmatpush.bf16.xpose.msra.mxu0 0
    %933 = vmatpush.bf16.xpose.msra.mxu0 0
    %934 = vmatpush.bf16.xpose.msra.mxu0 0
    %935 = vmatpush.bf16.xpose.msra.mxu0 %v926
    %936 = vmatmul.bf16.gmra.mxu0 %v923
    %v937 = vpop.f32.mrf.mxu0
    %v938 = vadd.f32 %v51, %v937
    %v939 = vpop.f32.mrf.mxu0
    %v940 = vadd.f32 %v52, %v939
    %941 = vdwg.mxu0
    %v942 = vsel %vm131, %v938, -inf
    %943 = vmax.xlane.f32.xlu0 %v942
    %v944 = vpop.xlane.xlu0 %943
    %v945 = vsel %vm131, %v940, -inf
    %946 = vmax.xlane.f32.xlu0 %v945
    %v947 = vpop.xlane.xlu0 %946
    %v948 = vsub.f32 %v938, %v944
    %v949 = vsub.f32 %v940, %v947
    %v950 = vmul.f32 %v948, 1.442695
    %v951 = vpow.pop %v950
    %v952 = vmul.f32 %v949, 1.442695
    %v953 = vpow.pop %v952
    %v954 = vsel %vm131, %v951, 0.0
    %955 = vadd.xlane.f32.xlu0 %v954
    %v956 = vpop.xlane.xlu0 %955
    %v957 = vsel %vm131, %v953, 0.0
    %958 = vadd.xlane.f32.xlu0 %v957
    %v959 = vpop.xlane.xlu0 %958
    %v960 = vrcp.pop %v956
    %v961 = vrcp.pop %v959
    %v962 = vmul.f32 %v951, %v960
    %v963 = vmul.f32 %v953, %v961
    %v964 = vpack.c.bf16 %v963, %v962
    %965 = vrot.lane.b32.xlu0 %v718, 40
    %v966 = vpop.permute.xlu0 %965
    %v969 = vsel %vm131, %v964, 0
    %971 = vmatpush.bf16.msra.mxu0 0
    %972 = vmatpush.bf16.msra.mxu0 0
    %973 = vmatpush.bf16.msra.mxu0 0
    %974 = vmatpush.bf16.msra.mxu0 0
    %975 = vmatpush.bf16.msra.mxu0 0
    %976 = vmatpush.bf16.msra.mxu0 0
    %977 = vmatpush.bf16.msra.mxu0 0
    %978 = vmatpush.bf16.msra.mxu0 %v966
    %979 = vmatmul.bf16.gmra.mxu0 %v969
    %v980 = vpop.f32.mrf.mxu0
    %v981 = vadd.f32 0.0, %v980
    %v982 = vpop.f32.mrf.mxu0
    %v983 = vadd.f32 0.0, %v982
    %984 = vdwg.mxu0
    %987 = vrot.lane.b32.xlu0 %v847, 8
    %v988 = vpop.permute.xlu0 %987
    %989 = vrot.lane.b32.xlu0 %v849, 8
    %v990 = vpop.permute.xlu0 %989
    %995 = vrot.lane.b32.xlu0 %v914, 16
    %v996 = vpop.permute.xlu0 %995
    %997 = vrot.lane.b32.xlu0 %v916, 16
    %v998 = vpop.permute.xlu0 %997
    %1003 = vrot.lane.b32.xlu0 %v981, 24
    %v1004 = vpop.permute.xlu0 %1003
    %1005 = vrot.lane.b32.xlu0 %v983, 24
    %v1006 = vpop.permute.xlu0 %1005
    %v1009 = vsel %vm110, %v780, %v988
    %v1010 = vsel %vm110, %v782, %v990
    %v1011 = vsel %vm131, %v1009, %v996
    %v1012 = vsel %vm131, %v1010, %v998
    %v1013 = vsel %vm404, %v1011, %v1004
    %v1014 = vsel %vm404, %v1012, %v1006
    %v1015 = vpack.c.bf16 %v1014, %v1013
    %s1016 = scalar_lea.vmem %s4, 16
    %v1017 = vld [vmem:[%s1016] sm:$0xf]
    %v1018 = vld [vmem:[%s1016 + $0x4] sm:$0xf]
    %v1019 = vld [vmem:[%s1016 + $0x8] sm:$0xf]
    %v1020 = vld [vmem:[%s1016 + $0xc] sm:$0xf]
    %s1021 = scalar_lea.vmem %s5, 1
    %v1022 = vld [vmem:[%s1021] sm:$0x1]
    %v1024 = vperm.slane %v1022, 0
    %v1030 = vunpack.c.l.b16 %v1017
    %v1031 = vunpack.c.l.b16 %v1018
    %v1032 = vunpack.c.l.b16 %v1019
    %v1033 = vunpack.c.l.b16 %v1020
    %v1034 = vpack.c.b16 %v1031, %v1030
    %v1035 = vpack.c.b16 %v1033, %v1032
    %v1039 = vsel %vm74, %v1015, 0
    %1041 = vmatpush.bf16.msra.mxu0 0
    %1042 = vmatpush.bf16.msra.mxu0 0
    %1043 = vmatpush.bf16.msra.mxu0 0
    %1044 = vmatpush.bf16.msra.mxu0 0
    %1045 = vmatpush.bf16.msra.mxu0 0
    %1046 = vmatpush.bf16.msra.mxu0 0
    %1047 = vmatpush.bf16.msra.mxu0 %v1035
    %1048 = vmatpush.bf16.msra.mxu0 %v1034
    %1049 = vmatmul.bf16.gmra.mxu0 %v1039
    %v1050 = vpop.f32.mrf.mxu0
    %v1051 = vadd.f32 %v1024, %v1050
    %v1052 = vpop.f32.mrf.mxu0
    %v1053 = vadd.f32 %v1024, %v1052
    %1054 = vdwg.mxu0
    %v1055 = vadd.f32 %v661, %v1051
    %v1056 = vadd.f32 %v662, %v1053
    %s1057 = scalar_lea.vmem %s6, 1
    %v1058 = vld [vmem:[%s1057] sm:$0x1]
    %s1059 = scalar_lea.vmem %s7, 1
    %v1060 = vld [vmem:[%s1059] sm:$0x1]
    %v1061 = vsel %vm74, %v1055, 0.0
    %1062 = vadd.xlane.f32.xlu0 %v1061
    %v1063 = vpop.xlane.xlu0 %1062
    %v1064 = vsel %vm74, %v1056, 0.0
    %1065 = vadd.xlane.f32.xlu0 %v1064
    %v1066 = vpop.xlane.xlu0 %1065
    %v1067 = vmul.f32 %v1063, %v461
    %v1068 = vmul.f32 %v1066, %v461
    %v1069 = vsub.f32 %v1055, %v1067
    %v1070 = vsub.f32 %v1056, %v1068
    %v1071 = vmul.f32 %v1069, %v1069
    %v1072 = vmul.f32 %v1070, %v1070
    %v1073 = vsel %vm74, %v1071, 0.0
    %1074 = vadd.xlane.f32.xlu0 %v1073
    %v1075 = vpop.xlane.xlu0 %1074
    %v1076 = vsel %vm74, %v1072, 0.0
    %1077 = vadd.xlane.f32.xlu0 %v1076
    %v1078 = vpop.xlane.xlu0 %1077
    %v1079 = vmul.f32 %v1075, %v461
    %v1080 = vmul.f32 %v1078, %v461
    %v1081 = vadd.f32 %v1079, 1e-05
    %v1082 = vadd.f32 %v1080, 1e-05
    %v1083 = vrsqrt.pop %v1081
    %v1084 = vmul.f32 %v1083, %v1081
    %v1085 = vmul.f32 %v1084, %v1083
    %v1086 = vmul.f32 0.5, %v1085
    %v1087 = vsub.f32 1.5, %v1086
    %v1088 = vmul.f32 %v1083, %v1087
    %vm1089 = vweird.f32 %v1081
    %vm1090 = vweird.f32 %v1083
    %vm1091 = vmor %vm1089, %vm1090
    %v1092 = vsel %vm1091, %v1083, %v1088
    %v1093 = vrsqrt.pop %v1082
    %v1094 = vmul.f32 %v1093, %v1082
    %v1095 = vmul.f32 %v1094, %v1093
    %v1096 = vmul.f32 0.5, %v1095
    %v1097 = vsub.f32 1.5, %v1096
    %v1098 = vmul.f32 %v1093, %v1097
    %vm1099 = vweird.f32 %v1082
    %vm1100 = vweird.f32 %v1093
    %vm1101 = vmor %vm1099, %vm1100
    %v1102 = vsel %vm1101, %v1093, %v1098
    %v1103 = vmul.f32 %v1069, %v1092
    %v1104 = vmul.f32 %v1070, %v1102
    %v1106 = vperm.slane %v1058, 0
    %v1108 = vmul.f32 %v1103, %v1106
    %v1109 = vmul.f32 %v1104, %v1106
    %v1111 = vperm.slane %v1060, 0
    %v1113 = vadd.f32 %v1108, %v1111
    %v1114 = vadd.f32 %v1109, %v1111
    %v1115 = vpack.c.bf16 %v1114, %v1113
    %s1116 = scalar_lea.vmem %s8, 16
    %v1117 = vld [vmem:[%s1116] sm:$0xf]
    %v1118 = vld [vmem:[%s1116 + $0x4] sm:$0xf]
    %v1119 = vld [vmem:[%s1116 + $0x8] sm:$0xf]
    %v1120 = vld [vmem:[%s1116 + $0xc] sm:$0xf]
    %s1121 = scalar_lea.vmem %s9, 1
    %v1122 = vld [vmem:[%s1121] sm:$0x1]
    %v1124 = vperm.slane %v1122, 0
    %v1130 = vunpack.c.l.b16 %v1117
    %v1131 = vunpack.c.l.b16 %v1118
    %v1132 = vunpack.c.l.b16 %v1119
    %v1133 = vunpack.c.l.b16 %v1120
    %v1134 = vpack.c.b16 %v1131, %v1130
    %v1135 = vpack.c.b16 %v1133, %v1132
    %v1139 = vsel %vm74, %v1115, 0
    %1141 = vmatpush.bf16.msra.mxu0 0
    %1142 = vmatpush.bf16.msra.mxu0 0
    %1143 = vmatpush.bf16.msra.mxu0 0
    %1144 = vmatpush.bf16.msra.mxu0 0
    %1145 = vmatpush.bf16.msra.mxu0 0
    %1146 = vmatpush.bf16.msra.mxu0 0
    %1147 = vmatpush.bf16.msra.mxu0 %v1135
    %1148 = vmatpush.bf16.msra.mxu0 %v1134
    %1149 = vmatmul.bf16.gmra.mxu0 %v1139
    %v1150 = vpop.f32.mrf.mxu0
    %v1151 = vadd.f32 %v1124, %v1150
    %v1152 = vpop.f32.mrf.mxu0
    %v1153 = vadd.f32 %v1124, %v1152
    %1154 = vdwg.mxu0
    %v1155 = vmax.f32 %v1151, 0.0
    %v1156 = vmax.f32 %v1153, 0.0
    %v1157 = vpack.c.bf16 %v1156, %v1155
    %s1158 = scalar_lea.vmem %s10, 32
    %v1159 = vld [vmem:[%s1158] sm:$0xf]
    %v1160 = vld [vmem:[%s1158 + $0x4] sm:$0xf]
    %v1161 = vld [vmem:[%s1158 + $0x8] sm:$0xf]
    %v1162 = vld [vmem:[%s1158 + $0xc] sm:$0xf]
    %v1163 = vld [vmem:[%s1158 + $0x10] sm:$0xf]
    %v1164 = vld [vmem:[%s1158 + $0x14] sm:$0xf]
    %v1165 = vld [vmem:[%s1158 + $0x18] sm:$0xf]
    %v1166 = vld [vmem:[%s1158 + $0x1c] sm:$0xf]
    %s1167 = scalar_lea.vmem %s11, 1
    %v1168 = vld [vmem:[%s1167] sm:$0x1]
    %v1170 = vperm.slane %v1168, 0
    %v1180 = vunpack.c.l.b16 %v1159
    %v1181 = vunpack.c.l.b16 %v1160
    %v1182 = vunpack.c.l.b16 %v1161
    %v1183 = vunpack.c.l.b16 %v1162
    %v1184 = vunpack.c.l.b16 %v1163
    %v1185 = vunpack.c.l.b16 %v1164
    %v1186 = vunpack.c.l.b16 %v1165
    %v1187 = vunpack.c.l.b16 %v1166
    %v1188 = vpack.c.b16 %v1181, %v1180
    %v1189 = vpack.c.b16 %v1183, %v1182
    %v1190 = vpack.c.b16 %v1185, %v1184
    %v1191 = vpack.c.b16 %v1187, %v1186
    %v1197 = vsel %vm587, %v1157, 0
    %1199 = vmatpush.bf16.msra.mxu0 0
    %1200 = vmatpush.bf16.msra.mxu0 0
    %1201 = vmatpush.bf16.msra.mxu0 0
    %1202 = vmatpush.bf16.msra.mxu0 0
    %1203 = vmatpush.bf16.msra.mxu0 %v1191
    %1204 = vmatpush.bf16.msra.mxu0 %v1190
    %1205 = vmatpush.bf16.msra.mxu0 %v1189
    %1206 = vmatpush.bf16.msra.mxu0 %v1188
    %1207 = vmatmul.bf16.gmra.mxu0 %v1197
    %v1208 = vpop.f32.mrf.mxu0
    %v1209 = vadd.f32 %v1170, %v1208
    %v1210 = vpop.f32.mrf.mxu0
    %v1211 = vadd.f32 %v1170, %v1210
    %1212 = vdwg.mxu0
    %v1213 = vadd.f32 %v1113, %v1209
    %v1214 = vadd.f32 %v1114, %v1211
    %s1215 = scalar_lea.vmem %s12, 1
    %v1216 = vld [vmem:[%s1215] sm:$0x1]
    %s1217 = scalar_lea.vmem %s13, 1
    %v1218 = vld [vmem:[%s1217] sm:$0x1]
    %v1219 = vsel %vm74, %v1213, 0.0
    %1220 = vadd.xlane.f32.xlu0 %v1219
    %v1221 = vpop.xlane.xlu0 %1220
    %v1222 = vsel %vm74, %v1214, 0.0
    %1223 = vadd.xlane.f32.xlu0 %v1222
    %v1224 = vpop.xlane.xlu0 %1223
    %v1225 = vmul.f32 %v1221, %v461
    %v1226 = vmul.f32 %v1224, %v461
    %v1227 = vsub.f32 %v1213, %v1225
    %v1228 = vsub.f32 %v1214, %v1226
    %v1229 = vmul.f32 %v1227, %v1227
    %v1230 = vmul.f32 %v1228, %v1228
    %v1231 = vsel %vm74, %v1229, 0.0
    %1232 = vadd.xlane.f32.xlu0 %v1231
    %v1233 = vpop.xlane.xlu0 %1232
    %v1234 = vsel %vm74, %v1230, 0.0
    %1235 = vadd.xlane.f32.xlu0 %v1234
    %v1236 = vpop.xlane.xlu0 %1235
    %v1237 = vmul.f32 %v1233, %v461
    %v1238 = vmul.f32 %v1236, %v461
    %v1239 = vadd.f32 %v1237, 1e-05
    %v1240 = vadd.f32 %v1238, 1e-05
    %v1241 = vrsqrt.pop %v1239
    %v1242 = vmul.f32 %v1241, %v1239
    %v1243 = vmul.f32 %v1242, %v1241
    %v1244 = vmul.f32 0.5, %v1243
    %v1245 = vsub.f32 1.5, %v1244
    %v1246 = vmul.f32 %v1241, %v1245
    %vm1247 = vweird.f32 %v1239
    %vm1248 = vweird.f32 %v1241
    %vm1249 = vmor %vm1247, %vm1248
    %v1250 = vsel %vm1249, %v1241, %v1246
    %v1251 = vrsqrt.pop %v1240
    %v1252 = vmul.f32 %v1251, %v1240
    %v1253 = vmul.f32 %v1252, %v1251
    %v1254 = vmul.f32 0.5, %v1253
    %v1255 = vsub.f32 1.5, %v1254
    %v1256 = vmul.f32 %v1251, %v1255
    %vm1257 = vweird.f32 %v1240
    %vm1258 = vweird.f32 %v1251
    %vm1259 = vmor %vm1257, %vm1258
    %v1260 = vsel %vm1259, %v1251, %v1256
    %v1261 = vmul.f32 %v1227, %v1250
    %v1262 = vmul.f32 %v1228, %v1260
    %v1264 = vperm.slane %v1216, 0
    %v1266 = vmul.f32 %v1261, %v1264
    %v1267 = vmul.f32 %v1262, %v1264
    %v1269 = vperm.slane %v1218, 0
    %v1271 = vadd.f32 %v1266, %v1269
    %v1272 = vadd.f32 %v1267, %v1269
    %1273 = vst.msk [vmem:[#allocation2] sm:$0xff] %vm74, %v1271
    %1274 = vst.msk [vmem:[#allocation2 + $0x8] sm:$0xff] %vm74, %v1272
    // Predicated region
    $region58: #{transformer_encoder.1} parent=1 // pred_check
      _
    $region59: #{transformer_encoder.1} parent=1 // pred_check_branch
      %1276 = sbr.rel (0) target = $region61
    $region60: #{transformer_encoder.1} parent=1 // pred_region
      %1278 = vsyncadd [#allocation3], 0
      %s1279 = sshll.u32 [#allocation2], 4
      %s1280 = int_to_ptr.vmem [resolvable:$true] %s1279
      %s1281 = sshll.u32 %s14, 4
      %s1282 = int_to_ptr.hbm [resolvable:$true] %s1281
      %1287 = dma.vmem_to_hbm [thread:$0]  %s1280, 256, %s1282, [#allocation3], 128, 128, 8
    $region61: #{transformer_encoder.1} parent=1 // pred_fallthru
      _
    // Predicated region
    $region62: #{transformer_encoder.1} parent=1 // pred_check
      _
    $region63: #{transformer_encoder.1} parent=1 // pred_check_branch
      %1289 = sbr.rel (0) target = $region65
    $region64: #{transformer_encoder.1} parent=1 // pred_region
      %1291 = dma.done [#allocation3], 256
    $region65: #{transformer_encoder.1} parent=1 // pred_fallthru
      _
    %1292 = vsyncpa [#allocation3], 1

</llo_original>
